<compile_context>
chip_gen: v7x
topology: tpu7x:2x2x1
jax: 0.10.0
libtpu: 0.0.40
codegen_flags: <defaults>
</compile_context>

<pallas_src>
import math

import jax
import jax.numpy as jnp
from jax import lax
from jax.experimental import pallas as pl
from jax.experimental.pallas import tpu as pltpu

HID1 = 32   # fc1 out_features
HID = 16    # GRU hidden size
OUT = 2     # fc2 out_features

_GEMM_CHUNK_ROWS = 512   # rows per hoisted-GEMM chunk (bounds live vregs per chunk)
_EPI_CHUNK_STEPS = 256   # time steps per fc2/mask/store epilogue chunk


def _round_up(x, m):
    return (x + m - 1) // m * m


# --------------------------------------------------------------------------------------------
# Fused kernel: per time tile -> [hoisted fc1 + W_ih GEMMs] -> serial GRU -> [fc2 + mask].
# Grid axis 0 iterates time tiles sequentially ("arbitrary"); h is carried in a VMEM scratch.
# --------------------------------------------------------------------------------------------
def _fused_kernel(x_ref, len_ref, w1_ref, b1_ref, wih_ref, bin_ref,
                  whh_ref, bnh_ref, w2l_ref, b2l_ref,
                  out_ref, h_ref, gi_ref, hs_ref):
    T_tile, B = out_ref.shape
    H = HID
    rows = T_tile * B
    tile = pl.program_id(0)

    # Fresh hidden state at the start of the sequence (time tiles run in order).
    @pl.when(tile == 0)
    def _init():
        h_ref[...] = jnp.zeros_like(h_ref)

    # ---- Hoisted fc1 -> tanh -> input-to-hidden projection (bulk GEMMs, static chunks) -----
    w1, b1 = w1_ref[...], b1_ref[...]
    wih, b_in = wih_ref[...], bin_ref[...]
    for r0 in range(0, rows, _GEMM_CHUNK_ROWS):
        rs = min(_GEMM_CHUNK_ROWS, rows - r0)
        x1 = jnp.tanh(jnp.dot(x_ref[r0:r0 + rs, :], w1,
                              preferred_element_type=jnp.float32) + b1)       # (rs, 32)
        gi_ref[r0:r0 + rs, :] = jnp.dot(x1, wih,
                                        preferred_element_type=jnp.float32) + b_in   # (rs, 48)

    # ---- Serial GRU recurrence over this tile's T_tile steps -------------------------------
    whh = whh_ref[...]          # (16, 48), gate order [r | z | n]
    bhh_n = bnh_ref[...]        # (1, 16)  n-gate hidden bias (must stay inside r * (.))

    def step(t, h):
        row = pl.multiple_of(t * B, B)
        gi = gi_ref[pl.ds(row, B), :]                                         # (B, 48)
        gh = jnp.dot(h, whh, preferred_element_type=jnp.float32)              # (B, 48)
        rz = jax.nn.sigmoid(gi[:, :2 * H] + gh[:, :2 * H])                    # fused r,z sigmoid
        r = rz[:, :H]
        z = rz[:, H:]
        n = jnp.tanh(gi[:, 2 * H:] + r * (gh[:, 2 * H:] + bhh_n))
        h_new = n + z * (h - n)                                               # == (1-z)*n + z*h
        hs_ref[t] = h_new
        return h_new

    h_ref[...] = lax.fori_loop(0, T_tile, step, h_ref[...], unroll=8)

    # ---- Hoisted fc2 (last channel only) + pack/pad masking, in static chunks --------------
    w2l = w2l_ref[...]          # (1, 1, 16)
    b2l = b2l_ref[...]          # (1, 1)
    lens = len_ref[...]         # (1, B) int32
    for c0 in range(0, T_tile, _EPI_CHUNK_STEPS):
        cs = min(_EPI_CHUNK_STEPS, T_tile - c0)
        y = jnp.sum(hs_ref[c0:c0 + cs] * w2l, axis=-1)                        # (cs, B)
        t_glob = (tile * T_tile + c0
                  + lax.broadcasted_iota(jnp.int32, (cs, B), 0))
        valid = t_glob < lens                                                 # (cs, B)
        out_ref[c0:c0 + cs, :] = jnp.where(valid, y, 0.0) + b2l               # bias-only at pads


# --------------------------------------------------------------------------------------------
# Parameters (PyTorch-style uniform(-1/sqrt(fan_in), 1/sqrt(fan_in)); weights stored (in, out)).
# --------------------------------------------------------------------------------------------
def init_params(key, dim_input):
    ks = jax.random.split(key, 8)

    def u(k, shape, fan_in):
        b = 1.0 / math.sqrt(fan_in)
        return jax.random.uniform(k, shape, jnp.float32, -b, b)

    return dict(
        w1=u(ks[0], (dim_input, HID1), dim_input),
        b1=u(ks[1], (1, HID1), dim_input),
        wih=u(ks[2], (HID1, 3 * HID), HID),
        bih=u(ks[3], (1, 3 * HID), HID),
        whh=u(ks[4], (HID, 3 * HID), HID),
        bhh=u(ks[5], (1, 3 * HID), HID),
        w2=u(ks[6], (HID, OUT), HID),
        b2=u(ks[7], (1, OUT), HID),
    )


# --------------------------------------------------------------------------------------------
# Wrapper
# --------------------------------------------------------------------------------------------
def my_variable_rnn_los(seqs, lengths, params, t_tile=None):
    """seqs: (B, T, D) f32, lengths: (B,) int (sorted descending, as pack_padded requires).
    Returns (B, max(lengths)) == PyTorch forward's out[:, :, -1] (full (B, T) under tracing)."""
    B, T, D = seqs.shape
    H = HID
    if t_tile is None:
        t_tile = min(_round_up(T, 8), 1024)
    t_tile = _round_up(t_tile, 8)
    T_pad = _round_up(T, t_tile)
    n_tiles = T_pad // t_tile

    x = seqs.astype(jnp.float32)
    if T_pad != T:
        x = jnp.pad(x, ((0, 0), (0, T_pad - T), (0, 0)))
    # Single layout change of the (small) input tensor: time-major, flattened to 2D rows
    # (row = t * B + b).  Done once in XLA, not per step in the kernel.
    x_tm = jnp.transpose(x, (1, 0, 2)).reshape(T_pad * B, D)

    # Fold the r/z hidden biases into the hoisted input-side bias (n-gate bias stays separate).
    b_in = params["bih"] + jnp.concatenate(
        [params["bhh"][:, :2 * H], jnp.zeros((1, H), jnp.float32)], axis=1)      # (1, 48)
    bhh_n = params["bhh"][:, 2 * H:]                                             # (1, 16)
    w2_last = params["w2"][:, OUT - 1].reshape(1, 1, H)                          # only channel -1
    b2_last = params["b2"][:, OUT - 1].reshape(1, 1)
    len_row = jnp.asarray(lengths, jnp.int32).reshape(1, B)

    def full(a):
        return pl.BlockSpec(a.shape, lambda i: (0,) * a.ndim)

    out_tb = pl.pallas_call(
        _fused_kernel,
        out_shape=jax.ShapeDtypeStruct((T_pad, B), jnp.float32),
        grid=(n_tiles,),
        in_specs=[pl.BlockSpec((t_tile * B, D), lambda i: (i, 0)),
                  full(len_row),
                  full(params["w1"]), full(params["b1"]),
                  full(params["wih"]), full(b_in),
                  full(params["whh"]), full(bhh_n),
                  full(w2_last), full(b2_last)],
        out_specs=pl.BlockSpec((t_tile, B), lambda i: (i, 0)),
        scratch_shapes=[pltpu.VMEM((B, H), jnp.float32),              # carried hidden state
                        pltpu.VMEM((t_tile * B, 3 * H), jnp.float32),  # dense 2D gate stream
                        pltpu.VMEM((t_tile, B, H), jnp.float32)],      # per-step hidden states
        compiler_params=pltpu.CompilerParams(
            dimension_semantics=("arbitrary",),
            vmem_limit_bytes=32 * 1024 * 1024),
    )(x_tm, len_row, params["w1"], params["b1"], params["wih"], b_in,
      params["whh"], bhh_n, w2_last, b2_last)

    out_bt = jnp.transpose(out_tb[:T, :], (1, 0))     # (B, T) -- tiny array, XLA-side
    try:
        # pad_packed_sequence returns max(lengths) timesteps
        t_out = int(jnp.max(jnp.asarray(lengths)))
    except (jax.errors.ConcretizationTypeError, jax.errors.TracerIntegerConversionError):
        return out_bt                                  # under jit/vmap: return full T
    return out_bt[:, :t_out]


# --------------------------------------------------------------------------------------------
# Pure-JAX reference matching the PyTorch module semantics.
# --------------------------------------------------------------------------------------------
def _reference(seqs, lengths, params):
    B, T, D = seqs.shape
    H = HID
    x = jnp.tanh(seqs @ params["w1"] + params["b1"])                # (B, T, 32)

    def step(h, x_t):
        gi = x_t @ params["wih"] + params["bih"]
        gh = h @ params["whh"] + params["bhh"]
        r = jax.nn.sigmoid(gi[:, :H] + gh[:, :H])
        z = jax.nn.sigmoid(gi[:, H:2 * H] + gh[:, H:2 * H])
        n = jnp.tanh(gi[:, 2 * H:] + r * gh[:, 2 * H:])
        h_new = (1.0 - z) * n + z * h
        return h_new, h_new

    _, hs = lax.scan(step, jnp.zeros((B, H), jnp.float32), jnp.transpose(x, (1, 0, 2)))
    hs = jnp.transpose(hs, (1, 0, 2))                               # (B, T, 16)
    mask = (jnp.arange(T)[None, :] < jnp.asarray(lengths)[:, None])[..., None]
    hs = jnp.where(mask, hs, 0.0)
    y = hs @ params["w2"] + params["b2"]                            # (B, T, 2)
    t_out = int(jnp.max(jnp.asarray(lengths)))
    return y[:, :t_out, -1]


if __name__ == "__main__":
    key = jax.random.PRNGKey(0)
    k_param, k1, k2, k3 = jax.random.split(key, 4)

    B, T, D = 2, 8, 24
    params = init_params(k_param, D)

    # Test 1: single time tile.
    seqs = jax.random.normal(k1, (B, T, D), jnp.float32)
    lengths = jnp.array([8, 5], jnp.int32)          # sorted descending (pack_padded default)
    out = jax.block_until_ready(my_variable_rnn_los(seqs, lengths, params))
    ref = _reference(seqs, lengths, params)
    assert out.shape == ref.shape, (out.shape, ref.shape)
    assert jnp.allclose(out, ref, rtol=1e-5, atol=1e-5), float(jnp.max(jnp.abs(out - ref)))

    # Test 2: multiple time tiles + time padding (carries h across grid steps).
    T2 = 19
    seqs2 = jax.random.normal(k2, (B, T2, D), jnp.float32)
    lengths2 = jnp.array([19, 11], jnp.int32)
    out2 = jax.block_until_ready(my_variable_rnn_los(seqs2, lengths2, params, t_tile=8))
    ref2 = _reference(seqs2, lengths2, params)
    assert out2.shape == ref2.shape, (out2.shape, ref2.shape)
    assert jnp.allclose(out2, ref2, rtol=1e-5, atol=1e-5), float(jnp.max(jnp.abs(out2 - ref2)))

    # Test 3: longer sequence exercising the chunked GEMM prologue / fc2 epilogue in one tile.
    T3 = 300
    seqs3 = jax.random.normal(k3, (B, T3, D), jnp.float32)
    lengths3 = jnp.array([300, 217], jnp.int32)
    out3 = jax.block_until_ready(my_variable_rnn_los(seqs3, lengths3, params))
    ref3 = _reference(seqs3, lengths3, params)
    assert out3.shape == ref3.shape, (out3.shape, ref3.shape)
    assert jnp.allclose(out3, ref3, rtol=1e-3, atol=1e-3), float(jnp.max(jnp.abs(out3 - ref3)))

    print("KERNEL_OK")
</pallas_src>

<mosaic_0001>
module attributes {stable_mosaic.version = 11 : i64} {
  func.func @_fused_kernel(%arg0: i32, %arg1: memref<16x24xf32, #tpu.memory_space<vmem>>, %arg2: memref<1x2xi32, #tpu.memory_space<vmem>>, %arg3: memref<24x32xf32, #tpu.memory_space<vmem>>, %arg4: memref<1x32xf32, #tpu.memory_space<vmem>>, %arg5: memref<32x48xf32, #tpu.memory_space<vmem>>, %arg6: memref<1x48xf32, #tpu.memory_space<vmem>>, %arg7: memref<16x48xf32, #tpu.memory_space<vmem>>, %arg8: memref<1x16xf32, #tpu.memory_space<vmem>>, %arg9: memref<1x1x16xf32, #tpu.memory_space<vmem>>, %arg10: memref<1x1xf32, #tpu.memory_space<vmem>>, %arg11: memref<8x2xf32, #tpu.memory_space<vmem>>, %arg12: memref<2x16xf32, #tpu.memory_space<vmem>>, %arg13: memref<16x48xf32, #tpu.memory_space<vmem>>, %arg14: memref<8x2x16xf32, #tpu.memory_space<vmem>>) attributes {dimension_semantics = [#tpu.dimension_semantics<arbitrary>], iteration_bounds = array<i64: 1>, scalar_prefetch = 0 : i64, scratch_operands = 3 : i64, tpu.core_type = #tpu.core_type<tc>, window_params = [{transform_indices = @transform_0, window_bounds = array<i64: 16, 24>}, {pipeline_mode = #tpu.pipeline_mode<synchronous>, transform_indices = @transform_1, window_bounds = array<i64: 1, 2>}, {pipeline_mode = #tpu.pipeline_mode<synchronous>, transform_indices = @transform_2, window_bounds = array<i64: 24, 32>}, {pipeline_mode = #tpu.pipeline_mode<synchronous>, transform_indices = @transform_3, window_bounds = array<i64: 1, 32>}, {pipeline_mode = #tpu.pipeline_mode<synchronous>, transform_indices = @transform_4, window_bounds = array<i64: 32, 48>}, {pipeline_mode = #tpu.pipeline_mode<synchronous>, transform_indices = @transform_5, window_bounds = array<i64: 1, 48>}, {pipeline_mode = #tpu.pipeline_mode<synchronous>, transform_indices = @transform_6, window_bounds = array<i64: 16, 48>}, {pipeline_mode = #tpu.pipeline_mode<synchronous>, transform_indices = @transform_7, window_bounds = array<i64: 1, 16>}, {pipeline_mode = #tpu.pipeline_mode<synchronous>, transform_indices = @transform_8, window_bounds = array<i64: 1, 1, 16>}, {pipeline_mode = #tpu.pipeline_mode<synchronous>, transform_indices = @transform_9, window_bounds = array<i64: 1, 1>}, {transform_indices = @transform_10, window_bounds = array<i64: 8, 2>}]} {
    %c0_i32 = arith.constant 0 : i32
    %0 = arith.cmpi eq, %arg0, %c0_i32 : i32
    %1 = arith.extui %0 : i1 to i32
    %c0_i32_0 = arith.constant 0 : i32
    %2 = arith.cmpi ne, %1, %c0_i32_0 : i32
    scf.if %2 {
      %cst_86 = arith.constant 0.000000e+00 : f32
      %271 = vector.broadcast %cst_86 : f32 to vector<2x16xf32>
      %c0_87 = arith.constant 0 : index
      %c0_88 = arith.constant 0 : index
      %272 = vector.load %arg12[%c0_87, %c0_88] : memref<2x16xf32, #tpu.memory_space<vmem>>, vector<2x16xf32>
      tpu.vector_store %arg12[%c0_87, %c0_88], %271 {strides = array<i32>} : memref<2x16xf32, #tpu.memory_space<vmem>>, vector<2x16xf32>,
    } else {
    }
    %c0 = arith.constant 0 : index
    %c0_1 = arith.constant 0 : index
    %3 = vector.load %arg3[%c0, %c0_1] : memref<24x32xf32, #tpu.memory_space<vmem>>, vector<24x32xf32>
    %c0_2 = arith.constant 0 : index
    %c0_3 = arith.constant 0 : index
    %4 = vector.load %arg4[%c0_2, %c0_3] : memref<1x32xf32, #tpu.memory_space<vmem>>, vector<1x32xf32>
    %c0_4 = arith.constant 0 : index
    %c0_5 = arith.constant 0 : index
    %5 = vector.load %arg5[%c0_4, %c0_5] : memref<32x48xf32, #tpu.memory_space<vmem>>, vector<32x48xf32>
    %c0_6 = arith.constant 0 : index
    %c0_7 = arith.constant 0 : index
    %6 = vector.load %arg6[%c0_6, %c0_7] : memref<1x48xf32, #tpu.memory_space<vmem>>, vector<1x48xf32>
    %c0_8 = arith.constant 0 : index
    %c0_9 = arith.constant 0 : index
    %7 = vector.load %arg1[%c0_8, %c0_9] : memref<16x24xf32, #tpu.memory_space<vmem>>, vector<16x24xf32>
    %cst = arith.constant dense<0.000000e+00> : vector<16x32xf32>
    %8 = tpu.matmul %7, %3, %cst {dimension_numbers = #tpu.dot_dimension_numbers<[1], [0], [0], [1], [0, 0, 1, 1], [], []>} : vector<16x24xf32>, vector<24x32xf32>, vector<16x32xf32> -> vector<16x32xf32>
    %9 = vector.broadcast %4 : vector<1x32xf32> to vector<16x32xf32>
    %10 = arith.addf %8, %9 : vector<16x32xf32>
    %11 = math.tanh %10 : vector<16x32xf32>
    %cst_10 = arith.constant dense<0.000000e+00> : vector<16x48xf32>
    %12 = tpu.matmul %11, %5, %cst_10 {dimension_numbers = #tpu.dot_dimension_numbers<[1], [0], [0], [1], [0, 0, 1, 1], [], []>} : vector<16x32xf32>, vector<32x48xf32>, vector<16x48xf32> -> vector<16x48xf32>
    %13 = vector.broadcast %6 : vector<1x48xf32> to vector<16x48xf32>
    %14 = arith.addf %12, %13 : vector<16x48xf32>
    %c0_11 = arith.constant 0 : index
    %c0_12 = arith.constant 0 : index
    %15 = vector.load %arg13[%c0_11, %c0_12] : memref<16x48xf32, #tpu.memory_space<vmem>>, vector<16x48xf32>
    tpu.vector_store %arg13[%c0_11, %c0_12], %14 {strides = array<i32>} : memref<16x48xf32, #tpu.memory_space<vmem>>, vector<16x48xf32>,
    %c0_13 = arith.constant 0 : index
    %c0_14 = arith.constant 0 : index
    %16 = vector.load %arg7[%c0_13, %c0_14] : memref<16x48xf32, #tpu.memory_space<vmem>>, vector<16x48xf32>
    %c0_15 = arith.constant 0 : index
    %c0_16 = arith.constant 0 : index
    %17 = vector.load %arg8[%c0_15, %c0_16] : memref<1x16xf32, #tpu.memory_space<vmem>>, vector<1x16xf32>
    %c0_17 = arith.constant 0 : index
    %c0_18 = arith.constant 0 : index
    %18 = vector.load %arg12[%c0_17, %c0_18] : memref<2x16xf32, #tpu.memory_space<vmem>>, vector<2x16xf32>
    %c0_i32_19 = arith.constant 0 : i32
    %c2_i32 = arith.constant 2 : i32
    %19 = arith.muli %c0_i32_19, %c2_i32 : i32
    %20 = tpu.assume_multiple %19, 2 : i32
    %21 = arith.index_cast %20 : i32 to index
    %c0_20 = arith.constant 0 : index
    %22 = vector.load %arg13[%21, %c0_20] : memref<16x48xf32, #tpu.memory_space<vmem>>, vector<2x48xf32>
    %cst_21 = arith.constant dense<0.000000e+00> : vector<2x48xf32>
    %23 = tpu.matmul %18, %16, %cst_21 {dimension_numbers = #tpu.dot_dimension_numbers<[1], [0], [0], [1], [0, 0, 1, 1], [], []>} : vector<2x16xf32>, vector<16x48xf32>, vector<2x48xf32> -> vector<2x48xf32>
    %24 = vector.extract_strided_slice %22 {offsets = [0, 0], sizes = [2, 32], strides = [1, 1]} : vector<2x48xf32> to vector<2x32xf32>
    %25 = vector.extract_strided_slice %23 {offsets = [0, 0], sizes = [2, 32], strides = [1, 1]} : vector<2x48xf32> to vector<2x32xf32>
    %26 = arith.addf %24, %25 : vector<2x32xf32>
    %27 = arith.negf %26 : vector<2x32xf32>
    %28 = math.exp %27 : vector<2x32xf32>
    %cst_22 = arith.constant 1.000000e+00 : f32
    %29 = vector.broadcast %cst_22 : f32 to vector<2x32xf32>
    %30 = arith.addf %29, %28 : vector<2x32xf32>
    %31 = arith.divf %29, %30 : vector<2x32xf32>
    %32 = vector.extract_strided_slice %31 {offsets = [0, 0], sizes = [2, 16], strides = [1, 1]} : vector<2x32xf32> to vector<2x16xf32>
    %33 = vector.extract_strided_slice %31 {offsets = [0, 16], sizes = [2, 16], strides = [1, 1]} : vector<2x32xf32> to vector<2x16xf32>
    %34 = vector.extract_strided_slice %22 {offsets = [0, 32], sizes = [2, 16], strides = [1, 1]} : vector<2x48xf32> to vector<2x16xf32>
    %35 = vector.extract_strided_slice %23 {offsets = [0, 32], sizes = [2, 16], strides = [1, 1]} : vector<2x48xf32> to vector<2x16xf32>
    %36 = vector.broadcast %17 : vector<1x16xf32> to vector<2x16xf32>
    %37 = arith.addf %35, %36 : vector<2x16xf32>
    %38 = arith.mulf %32, %37 : vector<2x16xf32>
    %39 = arith.addf %34, %38 : vector<2x16xf32>
    %40 = math.tanh %39 : vector<2x16xf32>
    %41 = arith.subf %18, %40 : vector<2x16xf32>
    %42 = arith.mulf %33, %41 : vector<2x16xf32>
    %43 = arith.addf %40, %42 : vector<2x16xf32>
    %44 = arith.index_cast %c0_i32_19 : i32 to index
    %c0_23 = arith.constant 0 : index
    %c0_24 = arith.constant 0 : index
    %45 = vector.load %arg14[%44, %c0_23, %c0_24] : memref<8x2x16xf32, #tpu.memory_space<vmem>>, vector<1x2x16xf32>
    %46 = vector.shape_cast %45 : vector<1x2x16xf32> to vector<2x16xf32>
    %47 = vector.shape_cast %43 : vector<2x16xf32> to vector<1x2x16xf32>
    tpu.vector_store %arg14[%44, %c0_23, %c0_24], %47 {strides = array<i32>} : memref<8x2x16xf32, #tpu.memory_space<vmem>>, vector<1x2x16xf32>,
    %c1_i32 = arith.constant 1 : i32
    %c2_i32_25 = arith.constant 2 : i32
    %48 = arith.muli %c1_i32, %c2_i32_25 : i32
    %49 = tpu.assume_multiple %48, 2 : i32
    %50 = arith.index_cast %49 : i32 to index
    %c0_26 = arith.constant 0 : index
    %51 = vector.load %arg13[%50, %c0_26] : memref<16x48xf32, #tpu.memory_space<vmem>>, vector<2x48xf32>
    %cst_27 = arith.constant dense<0.000000e+00> : vector<2x48xf32>
    %52 = tpu.matmul %43, %16, %cst_27 {dimension_numbers = #tpu.dot_dimension_numbers<[1], [0], [0], [1], [0, 0, 1, 1], [], []>} : vector<2x16xf32>, vector<16x48xf32>, vector<2x48xf32> -> vector<2x48xf32>
    %53 = vector.extract_strided_slice %51 {offsets = [0, 0], sizes = [2, 32], strides = [1, 1]} : vector<2x48xf32> to vector<2x32xf32>
    %54 = vector.extract_strided_slice %52 {offsets = [0, 0], sizes = [2, 32], strides = [1, 1]} : vector<2x48xf32> to vector<2x32xf32>
    %55 = arith.addf %53, %54 : vector<2x32xf32>
    %56 = arith.negf %55 : vector<2x32xf32>
    %57 = math.exp %56 : vector<2x32xf32>
    %cst_28 = arith.constant 1.000000e+00 : f32
    %58 = vector.broadcast %cst_28 : f32 to vector<2x32xf32>
    %59 = arith.addf %58, %57 : vector<2x32xf32>
    %60 = arith.divf %58, %59 : vector<2x32xf32>
    %61 = vector.extract_strided_slice %60 {offsets = [0, 0], sizes = [2, 16], strides = [1, 1]} : vector<2x32xf32> to vector<2x16xf32>
    %62 = vector.extract_strided_slice %60 {offsets = [0, 16], sizes = [2, 16], strides = [1, 1]} : vector<2x32xf32> to vector<2x16xf32>
    %63 = vector.extract_strided_slice %51 {offsets = [0, 32], sizes = [2, 16], strides = [1, 1]} : vector<2x48xf32> to vector<2x16xf32>
    %64 = vector.extract_strided_slice %52 {offsets = [0, 32], sizes = [2, 16], strides = [1, 1]} : vector<2x48xf32> to vector<2x16xf32>
    %65 = vector.broadcast %17 : vector<1x16xf32> to vector<2x16xf32>
    %66 = arith.addf %64, %65 : vector<2x16xf32>
    %67 = arith.mulf %61, %66 : vector<2x16xf32>
    %68 = arith.addf %63, %67 : vector<2x16xf32>
    %69 = math.tanh %68 : vector<2x16xf32>
    %70 = arith.subf %43, %69 : vector<2x16xf32>
    %71 = arith.mulf %62, %70 : vector<2x16xf32>
    %72 = arith.addf %69, %71 : vector<2x16xf32>
    %73 = arith.index_cast %c1_i32 : i32 to index
    %c0_29 = arith.constant 0 : index
    %c0_30 = arith.constant 0 : index
    %74 = vector.load %arg14[%73, %c0_29, %c0_30] : memref<8x2x16xf32, #tpu.memory_space<vmem>>, vector<1x2x16xf32>
    %75 = vector.shape_cast %74 : vector<1x2x16xf32> to vector<2x16xf32>
    %76 = vector.shape_cast %72 : vector<2x16xf32> to vector<1x2x16xf32>
    tpu.vector_store %arg14[%73, %c0_29, %c0_30], %76 {strides = array<i32>} : memref<8x2x16xf32, #tpu.memory_space<vmem>>, vector<1x2x16xf32>,
    %c2_i32_31 = arith.constant 2 : i32
    %c2_i32_32 = arith.constant 2 : i32
    %77 = arith.muli %c2_i32_31, %c2_i32_32 : i32
    %78 = tpu.assume_multiple %77, 2 : i32
    %79 = arith.index_cast %78 : i32 to index
    %c0_33 = arith.constant 0 : index
    %80 = vector.load %arg13[%79, %c0_33] : memref<16x48xf32, #tpu.memory_space<vmem>>, vector<2x48xf32>
    %cst_34 = arith.constant dense<0.000000e+00> : vector<2x48xf32>
    %81 = tpu.matmul %72, %16, %cst_34 {dimension_numbers = #tpu.dot_dimension_numbers<[1], [0], [0], [1], [0, 0, 1, 1], [], []>} : vector<2x16xf32>, vector<16x48xf32>, vector<2x48xf32> -> vector<2x48xf32>
    %82 = vector.extract_strided_slice %80 {offsets = [0, 0], sizes = [2, 32], strides = [1, 1]} : vector<2x48xf32> to vector<2x32xf32>
    %83 = vector.extract_strided_slice %81 {offsets = [0, 0], sizes = [2, 32], strides = [1, 1]} : vector<2x48xf32> to vector<2x32xf32>
    %84 = arith.addf %82, %83 : vector<2x32xf32>
    %85 = arith.negf %84 : vector<2x32xf32>
    %86 = math.exp %85 : vector<2x32xf32>
    %cst_35 = arith.constant 1.000000e+00 : f32
    %87 = vector.broadcast %cst_35 : f32 to vector<2x32xf32>
    %88 = arith.addf %87, %86 : vector<2x32xf32>
    %89 = arith.divf %87, %88 : vector<2x32xf32>
    %90 = vector.extract_strided_slice %89 {offsets = [0, 0], sizes = [2, 16], strides = [1, 1]} : vector<2x32xf32> to vector<2x16xf32>
    %91 = vector.extract_strided_slice %89 {offsets = [0, 16], sizes = [2, 16], strides = [1, 1]} : vector<2x32xf32> to vector<2x16xf32>
    %92 = vector.extract_strided_slice %80 {offsets = [0, 32], sizes = [2, 16], strides = [1, 1]} : vector<2x48xf32> to vector<2x16xf32>
    %93 = vector.extract_strided_slice %81 {offsets = [0, 32], sizes = [2, 16], strides = [1, 1]} : vector<2x48xf32> to vector<2x16xf32>
    %94 = vector.broadcast %17 : vector<1x16xf32> to vector<2x16xf32>
    %95 = arith.addf %93, %94 : vector<2x16xf32>
    %96 = arith.mulf %90, %95 : vector<2x16xf32>
    %97 = arith.addf %92, %96 : vector<2x16xf32>
    %98 = math.tanh %97 : vector<2x16xf32>
    %99 = arith.subf %72, %98 : vector<2x16xf32>
    %100 = arith.mulf %91, %99 : vector<2x16xf32>
    %101 = arith.addf %98, %100 : vector<2x16xf32>
    %102 = arith.index_cast %c2_i32_31 : i32 to index
    %c0_36 = arith.constant 0 : index
    %c0_37 = arith.constant 0 : index
    %103 = vector.load %arg14[%102, %c0_36, %c0_37] : memref<8x2x16xf32, #tpu.memory_space<vmem>>, vector<1x2x16xf32>
    %104 = vector.shape_cast %103 : vector<1x2x16xf32> to vector<2x16xf32>
    %105 = vector.shape_cast %101 : vector<2x16xf32> to vector<1x2x16xf32>
    tpu.vector_store %arg14[%102, %c0_36, %c0_37], %105 {strides = array<i32>} : memref<8x2x16xf32, #tpu.memory_space<vmem>>, vector<1x2x16xf32>,
    %c3_i32 = arith.constant 3 : i32
    %c2_i32_38 = arith.constant 2 : i32
    %106 = arith.muli %c3_i32, %c2_i32_38 : i32
    %107 = tpu.assume_multiple %106, 2 : i32
    %108 = arith.index_cast %107 : i32 to index
    %c0_39 = arith.constant 0 : index
    %109 = vector.load %arg13[%108, %c0_39] : memref<16x48xf32, #tpu.memory_space<vmem>>, vector<2x48xf32>
    %cst_40 = arith.constant dense<0.000000e+00> : vector<2x48xf32>
    %110 = tpu.matmul %101, %16, %cst_40 {dimension_numbers = #tpu.dot_dimension_numbers<[1], [0], [0], [1], [0, 0, 1, 1], [], []>} : vector<2x16xf32>, vector<16x48xf32>, vector<2x48xf32> -> vector<2x48xf32>
    %111 = vector.extract_strided_slice %109 {offsets = [0, 0], sizes = [2, 32], strides = [1, 1]} : vector<2x48xf32> to vector<2x32xf32>
    %112 = vector.extract_strided_slice %110 {offsets = [0, 0], sizes = [2, 32], strides = [1, 1]} : vector<2x48xf32> to vector<2x32xf32>
    %113 = arith.addf %111, %112 : vector<2x32xf32>
    %114 = arith.negf %113 : vector<2x32xf32>
    %115 = math.exp %114 : vector<2x32xf32>
    %cst_41 = arith.constant 1.000000e+00 : f32
    %116 = vector.broadcast %cst_41 : f32 to vector<2x32xf32>
    %117 = arith.addf %116, %115 : vector<2x32xf32>
    %118 = arith.divf %116, %117 : vector<2x32xf32>
    %119 = vector.extract_strided_slice %118 {offsets = [0, 0], sizes = [2, 16], strides = [1, 1]} : vector<2x32xf32> to vector<2x16xf32>
    %120 = vector.extract_strided_slice %118 {offsets = [0, 16], sizes = [2, 16], strides = [1, 1]} : vector<2x32xf32> to vector<2x16xf32>
    %121 = vector.extract_strided_slice %109 {offsets = [0, 32], sizes = [2, 16], strides = [1, 1]} : vector<2x48xf32> to vector<2x16xf32>
    %122 = vector.extract_strided_slice %110 {offsets = [0, 32], sizes = [2, 16], strides = [1, 1]} : vector<2x48xf32> to vector<2x16xf32>
    %123 = vector.broadcast %17 : vector<1x16xf32> to vector<2x16xf32>
    %124 = arith.addf %122, %123 : vector<2x16xf32>
    %125 = arith.mulf %119, %124 : vector<2x16xf32>
    %126 = arith.addf %121, %125 : vector<2x16xf32>
    %127 = math.tanh %126 : vector<2x16xf32>
    %128 = arith.subf %101, %127 : vector<2x16xf32>
    %129 = arith.mulf %120, %128 : vector<2x16xf32>
    %130 = arith.addf %127, %129 : vector<2x16xf32>
    %131 = arith.index_cast %c3_i32 : i32 to index
    %c0_42 = arith.constant 0 : index
    %c0_43 = arith.constant 0 : index
    %132 = vector.load %arg14[%131, %c0_42, %c0_43] : memref<8x2x16xf32, #tpu.memory_space<vmem>>, vector<1x2x16xf32>
    %133 = vector.shape_cast %132 : vector<1x2x16xf32> to vector<2x16xf32>
    %134 = vector.shape_cast %130 : vector<2x16xf32> to vector<1x2x16xf32>
    tpu.vector_store %arg14[%131, %c0_42, %c0_43], %134 {strides = array<i32>} : memref<8x2x16xf32, #tpu.memory_space<vmem>>, vector<1x2x16xf32>,
    %c4_i32 = arith.constant 4 : i32
    %c2_i32_44 = arith.constant 2 : i32
    %135 = arith.muli %c4_i32, %c2_i32_44 : i32
    %136 = tpu.assume_multiple %135, 2 : i32
    %137 = arith.index_cast %136 : i32 to index
    %c0_45 = arith.constant 0 : index
    %138 = vector.load %arg13[%137, %c0_45] : memref<16x48xf32, #tpu.memory_space<vmem>>, vector<2x48xf32>
    %cst_46 = arith.constant dense<0.000000e+00> : vector<2x48xf32>
    %139 = tpu.matmul %130, %16, %cst_46 {dimension_numbers = #tpu.dot_dimension_numbers<[1], [0], [0], [1], [0, 0, 1, 1], [], []>} : vector<2x16xf32>, vector<16x48xf32>, vector<2x48xf32> -> vector<2x48xf32>
    %140 = vector.extract_strided_slice %138 {offsets = [0, 0], sizes = [2, 32], strides = [1, 1]} : vector<2x48xf32> to vector<2x32xf32>
    %141 = vector.extract_strided_slice %139 {offsets = [0, 0], sizes = [2, 32], strides = [1, 1]} : vector<2x48xf32> to vector<2x32xf32>
    %142 = arith.addf %140, %141 : vector<2x32xf32>
    %143 = arith.negf %142 : vector<2x32xf32>
    %144 = math.exp %143 : vector<2x32xf32>
    %cst_47 = arith.constant 1.000000e+00 : f32
    %145 = vector.broadcast %cst_47 : f32 to vector<2x32xf32>
    %146 = arith.addf %145, %144 : vector<2x32xf32>
    %147 = arith.divf %145, %146 : vector<2x32xf32>
    %148 = vector.extract_strided_slice %147 {offsets = [0, 0], sizes = [2, 16], strides = [1, 1]} : vector<2x32xf32> to vector<2x16xf32>
    %149 = vector.extract_strided_slice %147 {offsets = [0, 16], sizes = [2, 16], strides = [1, 1]} : vector<2x32xf32> to vector<2x16xf32>
    %150 = vector.extract_strided_slice %138 {offsets = [0, 32], sizes = [2, 16], strides = [1, 1]} : vector<2x48xf32> to vector<2x16xf32>
    %151 = vector.extract_strided_slice %139 {offsets = [0, 32], sizes = [2, 16], strides = [1, 1]} : vector<2x48xf32> to vector<2x16xf32>
    %152 = vector.broadcast %17 : vector<1x16xf32> to vector<2x16xf32>
    %153 = arith.addf %151, %152 : vector<2x16xf32>
    %154 = arith.mulf %148, %153 : vector<2x16xf32>
    %155 = arith.addf %150, %154 : vector<2x16xf32>
    %156 = math.tanh %155 : vector<2x16xf32>
    %157 = arith.subf %130, %156 : vector<2x16xf32>
    %158 = arith.mulf %149, %157 : vector<2x16xf32>
    %159 = arith.addf %156, %158 : vector<2x16xf32>
    %160 = arith.index_cast %c4_i32 : i32 to index
    %c0_48 = arith.constant 0 : index
    %c0_49 = arith.constant 0 : index
    %161 = vector.load %arg14[%160, %c0_48, %c0_49] : memref<8x2x16xf32, #tpu.memory_space<vmem>>, vector<1x2x16xf32>
    %162 = vector.shape_cast %161 : vector<1x2x16xf32> to vector<2x16xf32>
    %163 = vector.shape_cast %159 : vector<2x16xf32> to vector<1x2x16xf32>
    tpu.vector_store %arg14[%160, %c0_48, %c0_49], %163 {strides = array<i32>} : memref<8x2x16xf32, #tpu.memory_space<vmem>>, vector<1x2x16xf32>,
    %c5_i32 = arith.constant 5 : i32
    %c2_i32_50 = arith.constant 2 : i32
    %164 = arith.muli %c5_i32, %c2_i32_50 : i32
    %165 = tpu.assume_multiple %164, 2 : i32
    %166 = arith.index_cast %165 : i32 to index
    %c0_51 = arith.constant 0 : index
    %167 = vector.load %arg13[%166, %c0_51] : memref<16x48xf32, #tpu.memory_space<vmem>>, vector<2x48xf32>
    %cst_52 = arith.constant dense<0.000000e+00> : vector<2x48xf32>
    %168 = tpu.matmul %159, %16, %cst_52 {dimension_numbers = #tpu.dot_dimension_numbers<[1], [0], [0], [1], [0, 0, 1, 1], [], []>} : vector<2x16xf32>, vector<16x48xf32>, vector<2x48xf32> -> vector<2x48xf32>
    %169 = vector.extract_strided_slice %167 {offsets = [0, 0], sizes = [2, 32], strides = [1, 1]} : vector<2x48xf32> to vector<2x32xf32>
    %170 = vector.extract_strided_slice %168 {offsets = [0, 0], sizes = [2, 32], strides = [1, 1]} : vector<2x48xf32> to vector<2x32xf32>
    %171 = arith.addf %169, %170 : vector<2x32xf32>
    %172 = arith.negf %171 : vector<2x32xf32>
    %173 = math.exp %172 : vector<2x32xf32>
    %cst_53 = arith.constant 1.000000e+00 : f32
    %174 = vector.broadcast %cst_53 : f32 to vector<2x32xf32>
    %175 = arith.addf %174, %173 : vector<2x32xf32>
    %176 = arith.divf %174, %175 : vector<2x32xf32>
    %177 = vector.extract_strided_slice %176 {offsets = [0, 0], sizes = [2, 16], strides = [1, 1]} : vector<2x32xf32> to vector<2x16xf32>
    %178 = vector.extract_strided_slice %176 {offsets = [0, 16], sizes = [2, 16], strides = [1, 1]} : vector<2x32xf32> to vector<2x16xf32>
    %179 = vector.extract_strided_slice %167 {offsets = [0, 32], sizes = [2, 16], strides = [1, 1]} : vector<2x48xf32> to vector<2x16xf32>
    %180 = vector.extract_strided_slice %168 {offsets = [0, 32], sizes = [2, 16], strides = [1, 1]} : vector<2x48xf32> to vector<2x16xf32>
    %181 = vector.broadcast %17 : vector<1x16xf32> to vector<2x16xf32>
    %182 = arith.addf %180, %181 : vector<2x16xf32>
    %183 = arith.mulf %177, %182 : vector<2x16xf32>
    %184 = arith.addf %179, %183 : vector<2x16xf32>
    %185 = math.tanh %184 : vector<2x16xf32>
    %186 = arith.subf %159, %185 : vector<2x16xf32>
    %187 = arith.mulf %178, %186 : vector<2x16xf32>
    %188 = arith.addf %185, %187 : vector<2x16xf32>
    %189 = arith.index_cast %c5_i32 : i32 to index
    %c0_54 = arith.constant 0 : index
    %c0_55 = arith.constant 0 : index
    %190 = vector.load %arg14[%189, %c0_54, %c0_55] : memref<8x2x16xf32, #tpu.memory_space<vmem>>, vector<1x2x16xf32>
    %191 = vector.shape_cast %190 : vector<1x2x16xf32> to vector<2x16xf32>
    %192 = vector.shape_cast %188 : vector<2x16xf32> to vector<1x2x16xf32>
    tpu.vector_store %arg14[%189, %c0_54, %c0_55], %192 {strides = array<i32>} : memref<8x2x16xf32, #tpu.memory_space<vmem>>, vector<1x2x16xf32>,
    %c6_i32 = arith.constant 6 : i32
    %c2_i32_56 = arith.constant 2 : i32
    %193 = arith.muli %c6_i32, %c2_i32_56 : i32
    %194 = tpu.assume_multiple %193, 2 : i32
    %195 = arith.index_cast %194 : i32 to index
    %c0_57 = arith.constant 0 : index
    %196 = vector.load %arg13[%195, %c0_57] : memref<16x48xf32, #tpu.memory_space<vmem>>, vector<2x48xf32>
    %cst_58 = arith.constant dense<0.000000e+00> : vector<2x48xf32>
    %197 = tpu.matmul %188, %16, %cst_58 {dimension_numbers = #tpu.dot_dimension_numbers<[1], [0], [0], [1], [0, 0, 1, 1], [], []>} : vector<2x16xf32>, vector<16x48xf32>, vector<2x48xf32> -> vector<2x48xf32>
    %198 = vector.extract_strided_slice %196 {offsets = [0, 0], sizes = [2, 32], strides = [1, 1]} : vector<2x48xf32> to vector<2x32xf32>
    %199 = vector.extract_strided_slice %197 {offsets = [0, 0], sizes = [2, 32], strides = [1, 1]} : vector<2x48xf32> to vector<2x32xf32>
    %200 = arith.addf %198, %199 : vector<2x32xf32>
    %201 = arith.negf %200 : vector<2x32xf32>
    %202 = math.exp %201 : vector<2x32xf32>
    %cst_59 = arith.constant 1.000000e+00 : f32
    %203 = vector.broadcast %cst_59 : f32 to vector<2x32xf32>
    %204 = arith.addf %203, %202 : vector<2x32xf32>
    %205 = arith.divf %203, %204 : vector<2x32xf32>
    %206 = vector.extract_strided_slice %205 {offsets = [0, 0], sizes = [2, 16], strides = [1, 1]} : vector<2x32xf32> to vector<2x16xf32>
    %207 = vector.extract_strided_slice %205 {offsets = [0, 16], sizes = [2, 16], strides = [1, 1]} : vector<2x32xf32> to vector<2x16xf32>
    %208 = vector.extract_strided_slice %196 {offsets = [0, 32], sizes = [2, 16], strides = [1, 1]} : vector<2x48xf32> to vector<2x16xf32>
    %209 = vector.extract_strided_slice %197 {offsets = [0, 32], sizes = [2, 16], strides = [1, 1]} : vector<2x48xf32> to vector<2x16xf32>
    %210 = vector.broadcast %17 : vector<1x16xf32> to vector<2x16xf32>
    %211 = arith.addf %209, %210 : vector<2x16xf32>
    %212 = arith.mulf %206, %211 : vector<2x16xf32>
    %213 = arith.addf %208, %212 : vector<2x16xf32>
    %214 = math.tanh %213 : vector<2x16xf32>
    %215 = arith.subf %188, %214 : vector<2x16xf32>
    %216 = arith.mulf %207, %215 : vector<2x16xf32>
    %217 = arith.addf %214, %216 : vector<2x16xf32>
    %218 = arith.index_cast %c6_i32 : i32 to index
    %c0_60 = arith.constant 0 : index
    %c0_61 = arith.constant 0 : index
    %219 = vector.load %arg14[%218, %c0_60, %c0_61] : memref<8x2x16xf32, #tpu.memory_space<vmem>>, vector<1x2x16xf32>
    %220 = vector.shape_cast %219 : vector<1x2x16xf32> to vector<2x16xf32>
    %221 = vector.shape_cast %217 : vector<2x16xf32> to vector<1x2x16xf32>
    tpu.vector_store %arg14[%218, %c0_60, %c0_61], %221 {strides = array<i32>} : memref<8x2x16xf32, #tpu.memory_space<vmem>>, vector<1x2x16xf32>,
    %c7_i32 = arith.constant 7 : i32
    %c2_i32_62 = arith.constant 2 : i32
    %222 = arith.muli %c7_i32, %c2_i32_62 : i32
    %223 = tpu.assume_multiple %222, 2 : i32
    %224 = arith.index_cast %223 : i32 to index
    %c0_63 = arith.constant 0 : index
    %225 = vector.load %arg13[%224, %c0_63] : memref<16x48xf32, #tpu.memory_space<vmem>>, vector<2x48xf32>
    %cst_64 = arith.constant dense<0.000000e+00> : vector<2x48xf32>
    %226 = tpu.matmul %217, %16, %cst_64 {dimension_numbers = #tpu.dot_dimension_numbers<[1], [0], [0], [1], [0, 0, 1, 1], [], []>} : vector<2x16xf32>, vector<16x48xf32>, vector<2x48xf32> -> vector<2x48xf32>
    %227 = vector.extract_strided_slice %225 {offsets = [0, 0], sizes = [2, 32], strides = [1, 1]} : vector<2x48xf32> to vector<2x32xf32>
    %228 = vector.extract_strided_slice %226 {offsets = [0, 0], sizes = [2, 32], strides = [1, 1]} : vector<2x48xf32> to vector<2x32xf32>
    %229 = arith.addf %227, %228 : vector<2x32xf32>
    %230 = arith.negf %229 : vector<2x32xf32>
    %231 = math.exp %230 : vector<2x32xf32>
    %cst_65 = arith.constant 1.000000e+00 : f32
    %232 = vector.broadcast %cst_65 : f32 to vector<2x32xf32>
    %233 = arith.addf %232, %231 : vector<2x32xf32>
    %234 = arith.divf %232, %233 : vector<2x32xf32>
    %235 = vector.extract_strided_slice %234 {offsets = [0, 0], sizes = [2, 16], strides = [1, 1]} : vector<2x32xf32> to vector<2x16xf32>
    %236 = vector.extract_strided_slice %234 {offsets = [0, 16], sizes = [2, 16], strides = [1, 1]} : vector<2x32xf32> to vector<2x16xf32>
    %237 = vector.extract_strided_slice %225 {offsets = [0, 32], sizes = [2, 16], strides = [1, 1]} : vector<2x48xf32> to vector<2x16xf32>
    %238 = vector.extract_strided_slice %226 {offsets = [0, 32], sizes = [2, 16], strides = [1, 1]} : vector<2x48xf32> to vector<2x16xf32>
    %239 = vector.broadcast %17 : vector<1x16xf32> to vector<2x16xf32>
    %240 = arith.addf %238, %239 : vector<2x16xf32>
    %241 = arith.mulf %235, %240 : vector<2x16xf32>
    %242 = arith.addf %237, %241 : vector<2x16xf32>
    %243 = math.tanh %242 : vector<2x16xf32>
    %244 = arith.subf %217, %243 : vector<2x16xf32>
    %245 = arith.mulf %236, %244 : vector<2x16xf32>
    %246 = arith.addf %243, %245 : vector<2x16xf32>
    %247 = arith.index_cast %c7_i32 : i32 to index
    %c0_66 = arith.constant 0 : index
    %c0_67 = arith.constant 0 : index
    %248 = vector.load %arg14[%247, %c0_66, %c0_67] : memref<8x2x16xf32, #tpu.memory_space<vmem>>, vector<1x2x16xf32>
    %249 = vector.shape_cast %248 : vector<1x2x16xf32> to vector<2x16xf32>
    %250 = vector.shape_cast %246 : vector<2x16xf32> to vector<1x2x16xf32>
    tpu.vector_store %arg14[%247, %c0_66, %c0_67], %250 {strides = array<i32>} : memref<8x2x16xf32, #tpu.memory_space<vmem>>, vector<1x2x16xf32>,
    %c8_i32 = arith.constant 8 : i32
    %c0_68 = arith.constant 0 : index
    %c0_69 = arith.constant 0 : index
    %251 = vector.load %arg12[%c0_68, %c0_69] : memref<2x16xf32, #tpu.memory_space<vmem>>, vector<2x16xf32>
    tpu.vector_store %arg12[%c0_68, %c0_69], %246 {strides = array<i32>} : memref<2x16xf32, #tpu.memory_space<vmem>>, vector<2x16xf32>,
    %c0_70 = arith.constant 0 : index
    %c0_71 = arith.constant 0 : index
    %c0_72 = arith.constant 0 : index
    %252 = vector.load %arg9[%c0_70, %c0_71, %c0_72] : memref<1x1x16xf32, #tpu.memory_space<vmem>>, vector<1x1x16xf32>
    %c0_73 = arith.constant 0 : index
    %c0_74 = arith.constant 0 : index
    %253 = vector.load %arg10[%c0_73, %c0_74] : memref<1x1xf32, #tpu.memory_space<vmem>>, vector<1x1xf32>
    %c0_75 = arith.constant 0 : index
    %c0_76 = arith.constant 0 : index
    %254 = vector.load %arg2[%c0_75, %c0_76] : memref<1x2xi32, #tpu.memory_space<vmem>>, vector<1x2xi32>
    %c0_77 = arith.constant 0 : index
    %c0_78 = arith.constant 0 : index
    %c0_79 = arith.constant 0 : index
    %255 = vector.load %arg14[%c0_77, %c0_78, %c0_79] : memref<8x2x16xf32, #tpu.memory_space<vmem>>, vector<8x2x16xf32>
    %256 = vector.broadcast %252 : vector<1x1x16xf32> to vector<8x2x16xf32>
    %257 = arith.mulf %255, %256 : vector<8x2x16xf32>
    %cst_80 = arith.constant dense<0.000000e+00> : vector<8x2xf32>
    %258 = vector.multi_reduction <add>, %257, %cst_80 [2] : vector<8x2x16xf32> to vector<8x2xf32>
    %c8_i32_81 = arith.constant 8 : i32
    %259 = arith.muli %arg0, %c8_i32_81 : i32
    %c0_i32_82 = arith.constant 0 : i32
    %260 = arith.addi %259, %c0_i32_82 : i32
    %261 = tpu.iota {dimensions = array<i32: 0>} : vector<8x2xi32>
    %262 = vector.broadcast %260 : i32 to vector<8x2xi32>
    %263 = arith.addi %262, %261 : vector<8x2xi32>
    %264 = vector.broadcast %254 : vector<1x2xi32> to vector<8x2xi32>
    %265 = arith.cmpi slt, %263, %264 : vector<8x2xi32>
    %cst_83 = arith.constant 0.000000e+00 : f32
    %266 = vector.broadcast %cst_83 : f32 to vector<8x2xf32>
    %267 = arith.select %265, %258, %266 : vector<8x2xi1>, vector<8x2xf32>
    %268 = vector.broadcast %253 : vector<1x1xf32> to vector<8x2xf32>
    %269 = arith.addf %267, %268 : vector<8x2xf32>
    %c0_84 = arith.constant 0 : index
    %c0_85 = arith.constant 0 : index
    %270 = vector.load %arg11[%c0_84, %c0_85] : memref<8x2xf32, #tpu.memory_space<vmem>>, vector<8x2xf32>
    tpu.vector_store %arg11[%c0_84, %c0_85], %269 {strides = array<i32>} : memref<8x2xf32, #tpu.memory_space<vmem>>, vector<8x2xf32>,
    return
  }
  func.func @transform_0(%arg0: i32) -> (i32, i32) {
    %c0_i32 = arith.constant 0 : i32
    %c0_i32_0 = arith.constant 0 : i32
    return %arg0, %c0_i32 : i32, i32
  }
  func.func @transform_1(%arg0: i32) -> (i32, i32) {
    %c0_i32 = arith.constant 0 : i32
    %c0_i32_0 = arith.constant 0 : i32
    %c0_i32_1 = arith.constant 0 : i32
    return %c0_i32, %c0_i32_0 : i32, i32
  }
  func.func @transform_2(%arg0: i32) -> (i32, i32) {
    %c0_i32 = arith.constant 0 : i32
    %c0_i32_0 = arith.constant 0 : i32
    %c0_i32_1 = arith.constant 0 : i32
    return %c0_i32, %c0_i32_0 : i32, i32
  }
  func.func @transform_3(%arg0: i32) -> (i32, i32) {
    %c0_i32 = arith.constant 0 : i32
    %c0_i32_0 = arith.constant 0 : i32
    %c0_i32_1 = arith.constant 0 : i32
    return %c0_i32, %c0_i32_0 : i32, i32
  }
  func.func @transform_4(%arg0: i32) -> (i32, i32) {
    %c0_i32 = arith.constant 0 : i32
    %c0_i32_0 = arith.constant 0 : i32
    %c0_i32_1 = arith.constant 0 : i32
    return %c0_i32, %c0_i32_0 : i32, i32
  }
  func.func @transform_5(%arg0: i32) -> (i32, i32) {
    %c0_i32 = arith.constant 0 : i32
    %c0_i32_0 = arith.constant 0 : i32
    %c0_i32_1 = arith.constant 0 : i32
    return %c0_i32, %c0_i32_0 : i32, i32
  }
  func.func @transform_6(%arg0: i32) -> (i32, i32) {
    %c0_i32 = arith.constant 0 : i32
    %c0_i32_0 = arith.constant 0 : i32
    %c0_i32_1 = arith.constant 0 : i32
    return %c0_i32, %c0_i32_0 : i32, i32
  }
  func.func @transform_7(%arg0: i32) -> (i32, i32) {
    %c0_i32 = arith.constant 0 : i32
    %c0_i32_0 = arith.constant 0 : i32
    %c0_i32_1 = arith.constant 0 : i32
    return %c0_i32, %c0_i32_0 : i32, i32
  }
  func.func @transform_8(%arg0: i32) -> (i32, i32, i32) {
    %c0_i32 = arith.constant 0 : i32
    %c0_i32_0 = arith.constant 0 : i32
    %c0_i32_1 = arith.constant 0 : i32
    %c0_i32_2 = arith.constant 0 : i32
    return %c0_i32, %c0_i32_0, %c0_i32_1 : i32, i32, i32
  }
  func.func @transform_9(%arg0: i32) -> (i32, i32) {
    %c0_i32 = arith.constant 0 : i32
    %c0_i32_0 = arith.constant 0 : i32
    %c0_i32_1 = arith.constant 0 : i32
    return %c0_i32, %c0_i32_0 : i32, i32
  }
  func.func @transform_10(%arg0: i32) -> (i32, i32) {
    %c0_i32 = arith.constant 0 : i32
    %c0_i32_0 = arith.constant 0 : i32
    return %arg0, %c0_i32 : i32, i32
  }
}

</mosaic_0001>

<llo_original>
// kernel: tpu_custom_call.1
$region0: #{tpu_custom_call.1}
  #allocation0 [shape = 'u32[]', space=smem, size = 0x4, offset = 0x4, fixed_abs, tag = 'smem constant byte address 0x4 - core index']
  #allocation1 [shape = 'u32[144,128]{1,0:T(1,128)}', space=vmem, size = 0x12000, scoped, tag = 'internal scratch']
  #allocation2 [shape = 'f32[2,16]{1,0:T(2,128)}', space=vmem, size = 0x400, scoped, tag = 'scratch operand']
  #allocation3 [shape = 'f32[16,48]{1,0:T(8,128)}', space=vmem, size = 0x2000, scoped, tag = 'scratch operand']
  #allocation4 [shape = 'f32[8,2,16]{2,1,0:T(2,128)}', space=vmem, size = 0x2000, scoped, tag = 'scratch operand']
  #allocation5 [shape = 'f32[1,1]{1,0:T(1,128)S(1)}', space=vmem, size = 0x200, scoped, tag = 'scoped memory for tpu_custom_call.1']
  %s0 = inlined_call_operand.hbm [shape: f32[16,24], index: 0, kind: input, shape index: {}]
  %s1 = inlined_call_operand.vmem [shape: s32[1,2], index: 1, kind: input, shape index: {}]
  %s2 = inlined_call_operand.hbm [shape: f32[24,32], index: 2, kind: input, shape index: {}]
  %s3 = inlined_call_operand.vmem [shape: f32[1,32], index: 3, kind: input, shape index: {}]
  %s4 = inlined_call_operand.hbm [shape: f32[32,48], index: 4, kind: input, shape index: {}]
  %s5 = inlined_call_operand.vmem [shape: f32[1,48], index: 5, kind: input, shape index: {}]
  %s6 = inlined_call_operand.vmem [shape: f32[16,48], index: 6, kind: input, shape index: {}]
  %s7 = inlined_call_operand.vmem [shape: f32[1,16], index: 7, kind: input, shape index: {}]
  %s8 = inlined_call_operand.vmem [shape: f32[1,1,16], index: 8, kind: input, shape index: {}]
  %s9 = inlined_call_operand.<no memory space> [shape: f32[1,1], index: 9, kind: input, shape index: {}]
  %s10 = inlined_call_operand.vmem [shape: f32[8,2], index: 10, kind: output, shape index: {}]
  %s11 = sld [smem:[#allocation0]]
  $region66: #{tpu_custom_call.1} parent=0
    _
  %s13 = ssub.s32 1, %s11
  %s14 = scalar_select 0, %s13, %s11
  %v15 = vstv %s9
  %16 = vst [vmem:[#allocation5] sm:$0x1] %v15
  $region1: #{tpu_custom_call.1} parent=0
    #allocation6 [shape = 'u8[8192]{0}', space=vmem, size = 0x2000, scoped, tag = 'input window, operand 0, single buffered']
    #allocation7 [shape = 's32[1]{0}', space=sflag, size = 0x4, scoped, tag = 'scoped memory for tpu_custom_call.1']
    #allocation8 [shape = 'u8[12288]{0}', space=vmem, size = 0x3000, scoped, tag = 'input window, operand 2, single buffered']
    #allocation9 [shape = 's32[1]{0}', space=sflag, size = 0x4, scoped, tag = 'scoped memory for tpu_custom_call.1']
    #allocation10 [shape = 'u8[16384]{0}', space=vmem, size = 0x4000, scoped, tag = 'input window, operand 4, single buffered']
    %17 = vsyncpa [#allocation7], 0
    %18 = vsyncpa [#allocation9], 0
    // Predicated region
    $region2: #{tpu_custom_call.1} parent=1 // pred_check
      _
    $region3: #{tpu_custom_call.1} parent=1 // pred_check_branch
      %20 = sbr.rel (0) target = $region5
    $region4: #{tpu_custom_call.1} parent=1 // pred_region
      %s22 = ssub.s32 256, 256
      %23 = vsyncadd [#allocation7], %s22
      %s24 = sshll.u32 [#allocation6], 4
      %s25 = int_to_ptr.vmem [resolvable:$true] %s24
      %30 = dma.hbm_to_vmem [thread:$0]  %s0, 256, %s25, [#allocation7], 128, 128, 8
    $region5: #{tpu_custom_call.1} parent=1 // pred_fallthru
      _
    // Predicated region
    $region6: #{tpu_custom_call.1} parent=1 // pred_check
      _
    $region7: #{tpu_custom_call.1} parent=1 // pred_check_branch
      %32 = sbr.rel (0) target = $region9
    $region8: #{tpu_custom_call.1} parent=1 // pred_region
      _
    $region9: #{tpu_custom_call.1} parent=1 // pred_fallthru
      _
    // Predicated region
    $region10: #{tpu_custom_call.1} parent=1 // pred_check
      _
    $region11: #{tpu_custom_call.1} parent=1 // pred_check_branch
      %34 = sbr.rel (0) target = $region13
    $region12: #{tpu_custom_call.1} parent=1 // pred_region
      %s36 = ssub.s32 384, 384
      %37 = vsyncadd [#allocation9], %s36
      %s38 = sshll.u32 [#allocation8], 4
      %s39 = int_to_ptr.vmem [resolvable:$true] %s38
      %44 = dma.hbm_to_vmem [thread:$0]  %s2, 384, %s39, [#allocation9], 128, 128, 8
    $region13: #{tpu_custom_call.1} parent=1 // pred_fallthru
      _
    // Predicated region
    $region14: #{tpu_custom_call.1} parent=1 // pred_check
      _
    $region15: #{tpu_custom_call.1} parent=1 // pred_check_branch
      %46 = sbr.rel (0) target = $region17
    $region16: #{tpu_custom_call.1} parent=1 // pred_region
      _
    $region17: #{tpu_custom_call.1} parent=1 // pred_fallthru
      _
    // Predicated region
    $region18: #{tpu_custom_call.1} parent=1 // pred_check
      _
    $region19: #{tpu_custom_call.1} parent=1 // pred_check_branch
      %48 = sbr.rel (0) target = $region21
    $region20: #{tpu_custom_call.1} parent=1 // pred_region
      %s50 = ssub.s32 512, 512
      %51 = vsyncadd [#allocation9], %s50
      %s52 = sshll.u32 [#allocation10], 4
      %s53 = int_to_ptr.vmem [resolvable:$true] %s52
      %58 = dma.hbm_to_vmem [thread:$0]  %s4, 512, %s53, [#allocation9], 128, 128, 8
    $region21: #{tpu_custom_call.1} parent=1 // pred_fallthru
      _
    // Predicated region
    $region22: #{tpu_custom_call.1} parent=1 // pred_check
      _
    $region23: #{tpu_custom_call.1} parent=1 // pred_check_branch
      %60 = sbr.rel (0) target = $region25
    $region24: #{tpu_custom_call.1} parent=1 // pred_region
      _
    $region25: #{tpu_custom_call.1} parent=1 // pred_fallthru
      _
    // Predicated region
    $region26: #{tpu_custom_call.1} parent=1 // pred_check
      _
    $region27: #{tpu_custom_call.1} parent=1 // pred_check_branch
      %62 = sbr.rel (0) target = $region29
    $region28: #{tpu_custom_call.1} parent=1 // pred_region
      _
    $region29: #{tpu_custom_call.1} parent=1 // pred_fallthru
      _
    // Predicated region
    $region30: #{tpu_custom_call.1} parent=1 // pred_check
      _
    $region31: #{tpu_custom_call.1} parent=1 // pred_check_branch
      %64 = sbr.rel (0) target = $region33
    $region32: #{tpu_custom_call.1} parent=1 // pred_region
      _
    $region33: #{tpu_custom_call.1} parent=1 // pred_fallthru
      _
    // Predicated region
    $region34: #{tpu_custom_call.1} parent=1 // pred_check
      _
    $region35: #{tpu_custom_call.1} parent=1 // pred_check_branch
      %66 = sbr.rel (0) target = $region37
    $region36: #{tpu_custom_call.1} parent=1 // pred_region
      _
    $region37: #{tpu_custom_call.1} parent=1 // pred_fallthru
      _
    // Predicated region
    $region38: #{tpu_custom_call.1} parent=1 // pred_check
      _
    $region39: #{tpu_custom_call.1} parent=1 // pred_check_branch
      %68 = sbr.rel (0) target = $region41
    $region40: #{tpu_custom_call.1} parent=1 // pred_region
      _
    $region41: #{tpu_custom_call.1} parent=1 // pred_fallthru
      _
    // Predicated region
    $region42: #{tpu_custom_call.1} parent=1 // pred_check
      _
    $region43: #{tpu_custom_call.1} parent=1 // pred_check_branch
      %70 = sbr.rel (0) target = $region45
    $region44: #{tpu_custom_call.1} parent=1 // pred_region
      %71 = dma.done [#allocation7], 256
    $region45: #{tpu_custom_call.1} parent=1 // pred_fallthru
      _
    // Predicated region
    $region46: #{tpu_custom_call.1} parent=1 // pred_check
      _
    $region47: #{tpu_custom_call.1} parent=1 // pred_check_branch
      %73 = sbr.rel (0) target = $region49
    $region48: #{tpu_custom_call.1} parent=1 // pred_region
      %74 = dma.done [#allocation9], 384
    $region49: #{tpu_custom_call.1} parent=1 // pred_fallthru
      _
    // Predicated region
    $region50: #{tpu_custom_call.1} parent=1 // pred_check
      _
    $region51: #{tpu_custom_call.1} parent=1 // pred_check_branch
      %76 = sbr.rel (0) target = $region53
    $region52: #{tpu_custom_call.1} parent=1 // pred_region
      %77 = dma.done [#allocation9], 512
    $region53: #{tpu_custom_call.1} parent=1 // pred_fallthru
      _
    %p78 = scmp.eq.s32.totalorder 0, 0
    // Predicated region
    $region54: #{tpu_custom_call.1} parent=1 // pred_check
      %p79 = pneg %p78
    $region55: #{tpu_custom_call.1} parent=1 // pred_check_branch
      %81 = sbr.rel (%p79) target = $region57
    $region56: #{tpu_custom_call.1} parent=1 // pred_region
      %vm82 = vcmask 123904
      %83 = vst.msk [vmem:[#allocation2] sm:$0x3] %vm82, 0.0
    $region57: #{tpu_custom_call.1} parent=1 // pred_fallthru
      _
    %v84 = vld [vmem:[#allocation8] sm:$0xff]
    %v85 = vld [vmem:[#allocation8 + $0x8] sm:$0xff]
    %v86 = vld [vmem:[#allocation8 + $0x10] sm:$0xff]
    %v87 = vld [vmem:[%s3] sm:$0x1]
    %v88 = vld [vmem:[#allocation10] sm:$0xff]
    %v89 = vld [vmem:[#allocation10 + $0x8] sm:$0xff]
    %v90 = vld [vmem:[#allocation10 + $0x10] sm:$0xff]
    %v91 = vld [vmem:[#allocation10 + $0x18] sm:$0xff]
    %v92 = vld [vmem:[%s5] sm:$0x1]
    %v93 = vld [vmem:[#allocation6] sm:$0xff]
    %v94 = vld [vmem:[#allocation6 + $0x8] sm:$0xff]
    %v96 = vlaneseq
    %v97 = vshrl.u32 %v96, 7
    %v98 = vsub.s32 0, %v97
    %v99 = vrot.slane %v87, %v98
    %vm101 = vcmask 195584
    %v103 = vsel %vm101, %v93, 0
    %v106 = vsel %vm101, %v94, 0
    %108 = vmatprep.subr.mxu0 0.0
    %109 = vmatpush1.msra.mxu0 %v84
    %110 = vmatprep.subr.mxu0 0.0
    %111 = vmatpush1.msra.mxu0 %v85
    %112 = vmatprep.subr.mxu0 0.0
    %113 = vmatpush1.msra.mxu0 %v86
    %114 = vmatprep.subr.mxu0 0.0
    %115 = vmatpush1.msra.mxu0 0.0
    %116 = vmatprep.subr.mxu0 0.0
    %117 = vmatpush1.msra.mxu0 0.0
    %118 = vmatprep.subr.mxu0 0.0
    %119 = vmatpush1.msra.mxu0 0.0
    %120 = vmatprep.subr.mxu0 0.0
    %121 = vmatpush1.msra.mxu0 0.0
    %122 = vmatprep.subr.mxu0 0.0
    %123 = vmatpush1.msra.mxu0 0.0
    %124 = vmatprep.subr.mxu0 0.0
    %125 = vmatpush1.msra.mxu0 0.0
    %126 = vmatprep.subr.mxu0 0.0
    %127 = vmatpush1.msra.mxu0 0.0
    %128 = vmatprep.subr.mxu0 0.0
    %129 = vmatpush1.msra.mxu0 0.0
    %130 = vmatprep.subr.mxu0 0.0
    %131 = vmatpush1.msra.mxu0 0.0
    %132 = vmatprep.subr.mxu0 0.0
    %133 = vmatpush1.msra.mxu0 0.0
    %134 = vmatprep.subr.mxu0 0.0
    %135 = vmatpush1.msra.mxu0 0.0
    %136 = vmatprep.subr.mxu0 0.0
    %137 = vmatpush1.msra.mxu0 0.0
    %138 = vmatprep.subr.mxu0 0.0
    %139 = vmatpush1.msra.mxu0 0.0
    %140 = vmatprep.subr.mxu0 0.0
    %141 = vmatpush1.msra.mxu0 0.0
    %142 = vmatprep.subr.mxu0 0.0
    %143 = vmatpush1.msra.mxu0 0.0
    %144 = vmatprep.subr.mxu0 0.0
    %145 = vmatpush1.msra.mxu0 0.0
    %146 = vmatprep.subr.mxu0 0.0
    %147 = vmatpush1.msra.mxu0 0.0
    %148 = vmatprep.subr.mxu0 0.0
    %149 = vmatpush1.msra.mxu0 0.0
    %150 = vmatprep.subr.mxu0 0.0
    %151 = vmatpush1.msra.mxu0 0.0
    %152 = vmatprep.subr.mxu0 0.0
    %153 = vmatpush1.msra.mxu0 0.0
    %154 = vmatprep.subr.mxu0 0.0
    %155 = vmatpush1.msra.mxu0 0.0
    %156 = vmatprep.subr.mxu0 0.0
    %157 = vmatpush1.msra.mxu0 0.0
    %158 = vmatprep.subr.mxu0 0.0
    %159 = vmatpush1.msra.mxu0 0.0
    %160 = vmatprep.subr.mxu0 0.0
    %161 = vmatpush1.msra.mxu0 0.0
    %162 = vmatprep.subr.mxu0 0.0
    %163 = vmatpush1.msra.mxu0 0.0
    %164 = vmatprep.subr.mxu0 0.0
    %165 = vmatpush1.msra.mxu0 0.0
    %166 = vmatprep.subr.mxu0 0.0
    %167 = vmatpush1.msra.mxu0 0.0
    %168 = vmatprep.subr.mxu0 0.0
    %169 = vmatpush1.msra.mxu0 0.0
    %170 = vmatprep.subr.mxu0 0.0
    %171 = vmatpush1.msra.mxu0 0.0
    %172 = vmatprep.mubr.f32.mxu0 0.0
    %173 = vmatmul.mubr.f32.gmra.mrb[0].mxu0 %v103
    %v174 = vpop.f32.mrb[0].mxu0
    %v175 = vadd.f32 %v99, %v174
    %v176 = vpop.f32.mrb[0].mxu0
    %177 = vmatprep.mubr.f32.mxu0 0.0
    %178 = vmatmul.mubr.f32.gmra.mrb[0].mxu0 %v106
    %v179 = vpop.f32.mrb[0].mxu0
    %v180 = vadd.f32 %v99, %v179
    %v181 = vpop.f32.mrb[0].mxu0
    %182 = vdwg.mxu0
    %v183 = vtanh.pop %v175
    %v184 = vtanh.pop %v180
    %v186 = vlaneseq
    %v187 = vshrl.u32 %v186, 7
    %v188 = vsub.s32 0, %v187
    %v189 = vrot.slane %v92, %v188
    %vm191 = vcmask 261120
    %v193 = vsel %vm191, %v183, 0
    %v196 = vsel %vm191, %v184, 0
    %198 = vmatprep.subr.mxu0 0.0
    %199 = vmatpush1.msra.mxu0 %v88
    %200 = vmatprep.subr.mxu0 0.0
    %201 = vmatpush1.msra.mxu0 %v89
    %202 = vmatprep.subr.mxu0 0.0
    %203 = vmatpush1.msra.mxu0 %v90
    %204 = vmatprep.subr.mxu0 0.0
    %205 = vmatpush1.msra.mxu0 %v91
    %206 = vmatprep.subr.mxu0 0.0
    %207 = vmatpush1.msra.mxu0 0.0
    %208 = vmatprep.subr.mxu0 0.0
    %209 = vmatpush1.msra.mxu0 0.0
    %210 = vmatprep.subr.mxu0 0.0
    %211 = vmatpush1.msra.mxu0 0.0
    %212 = vmatprep.subr.mxu0 0.0
    %213 = vmatpush1.msra.mxu0 0.0
    %214 = vmatprep.subr.mxu0 0.0
    %215 = vmatpush1.msra.mxu0 0.0
    %216 = vmatprep.subr.mxu0 0.0
    %217 = vmatpush1.msra.mxu0 0.0
    %218 = vmatprep.subr.mxu0 0.0
    %219 = vmatpush1.msra.mxu0 0.0
    %220 = vmatprep.subr.mxu0 0.0
    %221 = vmatpush1.msra.mxu0 0.0
    %222 = vmatprep.subr.mxu0 0.0
    %223 = vmatpush1.msra.mxu0 0.0
    %224 = vmatprep.subr.mxu0 0.0
    %225 = vmatpush1.msra.mxu0 0.0
    %226 = vmatprep.subr.mxu0 0.0
    %227 = vmatpush1.msra.mxu0 0.0
    %228 = vmatprep.subr.mxu0 0.0
    %229 = vmatpush1.msra.mxu0 0.0
    %230 = vmatprep.subr.mxu0 0.0
    %231 = vmatpush1.msra.mxu0 0.0
    %232 = vmatprep.subr.mxu0 0.0
    %233 = vmatpush1.msra.mxu0 0.0
    %234 = vmatprep.subr.mxu0 0.0
    %235 = vmatpush1.msra.mxu0 0.0
    %236 = vmatprep.subr.mxu0 0.0
    %237 = vmatpush1.msra.mxu0 0.0
    %238 = vmatprep.subr.mxu0 0.0
    %239 = vmatpush1.msra.mxu0 0.0
    %240 = vmatprep.subr.mxu0 0.0
    %241 = vmatpush1.msra.mxu0 0.0
    %242 = vmatprep.subr.mxu0 0.0
    %243 = vmatpush1.msra.mxu0 0.0
    %244 = vmatprep.subr.mxu0 0.0
    %245 = vmatpush1.msra.mxu0 0.0
    %246 = vmatprep.subr.mxu0 0.0
    %247 = vmatpush1.msra.mxu0 0.0
    %248 = vmatprep.subr.mxu0 0.0
    %249 = vmatpush1.msra.mxu0 0.0
    %250 = vmatprep.subr.mxu0 0.0
    %251 = vmatpush1.msra.mxu0 0.0
    %252 = vmatprep.subr.mxu0 0.0
    %253 = vmatpush1.msra.mxu0 0.0
    %254 = vmatprep.subr.mxu0 0.0
    %255 = vmatpush1.msra.mxu0 0.0
    %256 = vmatprep.subr.mxu0 0.0
    %257 = vmatpush1.msra.mxu0 0.0
    %258 = vmatprep.subr.mxu0 0.0
    %259 = vmatpush1.msra.mxu0 0.0
    %260 = vmatprep.subr.mxu0 0.0
    %261 = vmatpush1.msra.mxu0 0.0
    %262 = vmatprep.mubr.f32.mxu0 0.0
    %263 = vmatmul.mubr.f32.gmra.mrb[0].mxu0 %v193
    %v264 = vpop.f32.mrb[0].mxu0
    %v265 = vadd.f32 %v189, %v264
    %v266 = vpop.f32.mrb[0].mxu0
    %267 = vmatprep.mubr.f32.mxu0 0.0
    %268 = vmatmul.mubr.f32.gmra.mrb[0].mxu0 %v196
    %v269 = vpop.f32.mrb[0].mxu0
    %v270 = vadd.f32 %v189, %v269
    %v271 = vpop.f32.mrb[0].mxu0
    %272 = vdwg.mxu0
    %vm273 = vcmask 392192
    %274 = vst.msk [vmem:[#allocation3] sm:$0xff] %vm273, %v265
    %275 = vst.msk [vmem:[#allocation3 + $0x8] sm:$0xff] %vm273, %v270
    %v276 = vld [vmem:[%s6] sm:$0xff]
    %v277 = vld [vmem:[%s6 + $0x8] sm:$0xff]
    %v278 = vld [vmem:[%s7] sm:$0x1]
    %v279 = vld [vmem:[#allocation2] sm:$0x3]
    %v280 = vld [vmem:[#allocation3] sm:$0x3]
    %vm281 = vcmask 130048
    %v283 = vsel %vm281, %v279, 0
    %285 = vmatprep.subr.mxu0 0.0
    %286 = vmatpush1.msra.mxu0 %v276
    %287 = vmatprep.subr.mxu0 0.0
    %288 = vmatpush1.msra.mxu0 %v277
    %289 = vmatprep.subr.mxu0 0.0
    %290 = vmatpush1.msra.mxu0 0.0
    %291 = vmatprep.subr.mxu0 0.0
    %292 = vmatpush1.msra.mxu0 0.0
    %293 = vmatprep.subr.mxu0 0.0
    %294 = vmatpush1.msra.mxu0 0.0
    %295 = vmatprep.subr.mxu0 0.0
    %296 = vmatpush1.msra.mxu0 0.0
    %297 = vmatprep.subr.mxu0 0.0
    %298 = vmatpush1.msra.mxu0 0.0
    %299 = vmatprep.subr.mxu0 0.0
    %300 = vmatpush1.msra.mxu0 0.0
    %301 = vmatprep.subr.mxu0 0.0
    %302 = vmatpush1.msra.mxu0 0.0
    %303 = vmatprep.subr.mxu0 0.0
    %304 = vmatpush1.msra.mxu0 0.0
    %305 = vmatprep.subr.mxu0 0.0
    %306 = vmatpush1.msra.mxu0 0.0
    %307 = vmatprep.subr.mxu0 0.0
    %308 = vmatpush1.msra.mxu0 0.0
    %309 = vmatprep.subr.mxu0 0.0
    %310 = vmatpush1.msra.mxu0 0.0
    %311 = vmatprep.subr.mxu0 0.0
    %312 = vmatpush1.msra.mxu0 0.0
    %313 = vmatprep.subr.mxu0 0.0
    %314 = vmatpush1.msra.mxu0 0.0
    %315 = vmatprep.subr.mxu0 0.0
    %316 = vmatpush1.msra.mxu0 0.0
    %317 = vmatprep.subr.mxu0 0.0
    %318 = vmatpush1.msra.mxu0 0.0
    %319 = vmatprep.subr.mxu0 0.0
    %320 = vmatpush1.msra.mxu0 0.0
    %321 = vmatprep.subr.mxu0 0.0
    %322 = vmatpush1.msra.mxu0 0.0
    %323 = vmatprep.subr.mxu0 0.0
    %324 = vmatpush1.msra.mxu0 0.0
    %325 = vmatprep.subr.mxu0 0.0
    %326 = vmatpush1.msra.mxu0 0.0
    %327 = vmatprep.subr.mxu0 0.0
    %328 = vmatpush1.msra.mxu0 0.0
    %329 = vmatprep.subr.mxu0 0.0
    %330 = vmatpush1.msra.mxu0 0.0
    %331 = vmatprep.subr.mxu0 0.0
    %332 = vmatpush1.msra.mxu0 0.0
    %333 = vmatprep.subr.mxu0 0.0
    %334 = vmatpush1.msra.mxu0 0.0
    %335 = vmatprep.subr.mxu0 0.0
    %336 = vmatpush1.msra.mxu0 0.0
    %337 = vmatprep.subr.mxu0 0.0
    %338 = vmatpush1.msra.mxu0 0.0
    %339 = vmatprep.subr.mxu0 0.0
    %340 = vmatpush1.msra.mxu0 0.0
    %341 = vmatprep.subr.mxu0 0.0
    %342 = vmatpush1.msra.mxu0 0.0
    %343 = vmatprep.subr.mxu0 0.0
    %344 = vmatpush1.msra.mxu0 0.0
    %345 = vmatprep.subr.mxu0 0.0
    %346 = vmatpush1.msra.mxu0 0.0
    %347 = vmatprep.subr.mxu0 0.0
    %348 = vmatpush1.msra.mxu0 0.0
    %349 = vmatprep.mubr.f32.mxu0 0.0
    %350 = vmatmul.mubr.f32.gmra.mrb[0].mxu0 %v283
    %v351 = vpop.f32.mrb[0].mxu0
    %v352 = vadd.f32 0.0, %v351
    %v353 = vpop.f32.mrb[0].mxu0
    %354 = vdwg.mxu0
    %v355 = vadd.f32 %v280, %v352
    %v356 = vxor.u32 %v355, 2147483648
    %v357 = vmul.f32 %v356, 1.442695
    %v358 = vpow.pop %v357
    %v359 = vadd.f32 %v358, 1.0
    %v360 = vrcp.pop %v359
    %v361 = vmul.f32 1.0, %v360
    %v363 = vlaneseq
    %v364 = vshrl.u32 %v363, 7
    %v365 = vsub.s32 0, %v364
    %v366 = vrot.slane %v278, %v365
    %367 = vrot.lane.b32.xlu0 %v366, 32
    %v368 = vpop.permute.xlu0 %367
    %v370 = vadd.f32 %v352, %v368
    %372 = vrot.lane.b32.xlu0 %v370, 96
    %v373 = vpop.permute.xlu0 %372
    %v375 = vmul.f32 %v361, %v373
    %377 = vrot.lane.b32.xlu0 %v375, 32
    %v378 = vpop.permute.xlu0 %377
    %v380 = vadd.f32 %v280, %v378
    %v381 = vtanh.pop %v380
    %383 = vrot.lane.b32.xlu0 %v381, 96
    %v384 = vpop.permute.xlu0 %383
    %v386 = vsub.f32 %v279, %v384
    %388 = vrot.lane.b32.xlu0 %v386, 16
    %v389 = vpop.permute.xlu0 %388
    %v391 = vmul.f32 %v361, %v389
    %393 = vrot.lane.b32.xlu0 %v391, 16
    %v394 = vpop.permute.xlu0 %393
    %v396 = vadd.f32 %v381, %v394
    %398 = vrot.lane.b32.xlu0 %v396, 96
    %v399 = vpop.permute.xlu0 %398
    %vm401 = vcmask 123904
    %402 = vst.msk [vmem:[#allocation4] sm:$0x3] %vm401, %v399
    %s403 = scalar_lea.vmem [#allocation3], 2
    %v404 = vld [vmem:[%s403] sm:$0x3]
    %v405 = vsel %vm281, %v399, 0
    %407 = vmatprep.subr.mxu0 0.0
    %408 = vmatpush1.msra.mxu0 %v276
    %409 = vmatprep.subr.mxu0 0.0
    %410 = vmatpush1.msra.mxu0 %v277
    %411 = vmatprep.subr.mxu0 0.0
    %412 = vmatpush1.msra.mxu0 0.0
    %413 = vmatprep.subr.mxu0 0.0
    %414 = vmatpush1.msra.mxu0 0.0
    %415 = vmatprep.subr.mxu0 0.0
    %416 = vmatpush1.msra.mxu0 0.0
    %417 = vmatprep.subr.mxu0 0.0
    %418 = vmatpush1.msra.mxu0 0.0
    %419 = vmatprep.subr.mxu0 0.0
    %420 = vmatpush1.msra.mxu0 0.0
    %421 = vmatprep.subr.mxu0 0.0
    %422 = vmatpush1.msra.mxu0 0.0
    %423 = vmatprep.subr.mxu0 0.0
    %424 = vmatpush1.msra.mxu0 0.0
    %425 = vmatprep.subr.mxu0 0.0
    %426 = vmatpush1.msra.mxu0 0.0
    %427 = vmatprep.subr.mxu0 0.0
    %428 = vmatpush1.msra.mxu0 0.0
    %429 = vmatprep.subr.mxu0 0.0
    %430 = vmatpush1.msra.mxu0 0.0
    %431 = vmatprep.subr.mxu0 0.0
    %432 = vmatpush1.msra.mxu0 0.0
    %433 = vmatprep.subr.mxu0 0.0
    %434 = vmatpush1.msra.mxu0 0.0
    %435 = vmatprep.subr.mxu0 0.0
    %436 = vmatpush1.msra.mxu0 0.0
    %437 = vmatprep.subr.mxu0 0.0
    %438 = vmatpush1.msra.mxu0 0.0
    %439 = vmatprep.subr.mxu0 0.0
    %440 = vmatpush1.msra.mxu0 0.0
    %441 = vmatprep.subr.mxu0 0.0
    %442 = vmatpush1.msra.mxu0 0.0
    %443 = vmatprep.subr.mxu0 0.0
    %444 = vmatpush1.msra.mxu0 0.0
    %445 = vmatprep.subr.mxu0 0.0
    %446 = vmatpush1.msra.mxu0 0.0
    %447 = vmatprep.subr.mxu0 0.0
    %448 = vmatpush1.msra.mxu0 0.0
    %449 = vmatprep.subr.mxu0 0.0
    %450 = vmatpush1.msra.mxu0 0.0
    %451 = vmatprep.subr.mxu0 0.0
    %452 = vmatpush1.msra.mxu0 0.0
    %453 = vmatprep.subr.mxu0 0.0
    %454 = vmatpush1.msra.mxu0 0.0
    %455 = vmatprep.subr.mxu0 0.0
    %456 = vmatpush1.msra.mxu0 0.0
    %457 = vmatprep.subr.mxu0 0.0
    %458 = vmatpush1.msra.mxu0 0.0
    %459 = vmatprep.subr.mxu0 0.0
    %460 = vmatpush1.msra.mxu0 0.0
    %461 = vmatprep.subr.mxu0 0.0
    %462 = vmatpush1.msra.mxu0 0.0
    %463 = vmatprep.subr.mxu0 0.0
    %464 = vmatpush1.msra.mxu0 0.0
    %465 = vmatprep.subr.mxu0 0.0
    %466 = vmatpush1.msra.mxu0 0.0
    %467 = vmatprep.subr.mxu0 0.0
    %468 = vmatpush1.msra.mxu0 0.0
    %469 = vmatprep.subr.mxu0 0.0
    %470 = vmatpush1.msra.mxu0 0.0
    %471 = vmatprep.mubr.f32.mxu0 0.0
    %472 = vmatmul.mubr.f32.gmra.mrb[0].mxu0 %v405
    %v473 = vpop.f32.mrb[0].mxu0
    %v474 = vadd.f32 0.0, %v473
    %v475 = vpop.f32.mrb[0].mxu0
    %476 = vdwg.mxu0
    %v477 = vadd.f32 %v404, %v474
    %v478 = vxor.u32 %v477, 2147483648
    %v479 = vmul.f32 %v478, 1.442695
    %v480 = vpow.pop %v479
    %v481 = vadd.f32 %v480, 1.0
    %v482 = vrcp.pop %v481
    %v483 = vmul.f32 1.0, %v482
    %v484 = vadd.f32 %v474, %v368
    %486 = vrot.lane.b32.xlu0 %v484, 96
    %v487 = vpop.permute.xlu0 %486
    %v489 = vmul.f32 %v483, %v487
    %491 = vrot.lane.b32.xlu0 %v489, 32
    %v492 = vpop.permute.xlu0 %491
    %v494 = vadd.f32 %v404, %v492
    %v495 = vtanh.pop %v494
    %v496 = vsub.f32 %v396, %v495
    %498 = vrot.lane.b32.xlu0 %v496, 112
    %v499 = vpop.permute.xlu0 %498
    %v501 = vmul.f32 %v483, %v499
    %503 = vrot.lane.b32.xlu0 %v501, 16
    %v504 = vpop.permute.xlu0 %503
    %v506 = vadd.f32 %v495, %v504
    %508 = vrot.lane.b32.xlu0 %v506, 96
    %v509 = vpop.permute.xlu0 %508
    %s511 = scalar_lea.vmem [#allocation4], 2
    %512 = vst.msk [vmem:[%s511] sm:$0x3] %vm401, %v509
    %s513 = scalar_lea.vmem [#allocation3], 4
    %v514 = vld [vmem:[%s513] sm:$0x3]
    %v515 = vsel %vm281, %v509, 0
    %517 = vmatprep.subr.mxu0 0.0
    %518 = vmatpush1.msra.mxu0 %v276
    %519 = vmatprep.subr.mxu0 0.0
    %520 = vmatpush1.msra.mxu0 %v277
    %521 = vmatprep.subr.mxu0 0.0
    %522 = vmatpush1.msra.mxu0 0.0
    %523 = vmatprep.subr.mxu0 0.0
    %524 = vmatpush1.msra.mxu0 0.0
    %525 = vmatprep.subr.mxu0 0.0
    %526 = vmatpush1.msra.mxu0 0.0
    %527 = vmatprep.subr.mxu0 0.0
    %528 = vmatpush1.msra.mxu0 0.0
    %529 = vmatprep.subr.mxu0 0.0
    %530 = vmatpush1.msra.mxu0 0.0
    %531 = vmatprep.subr.mxu0 0.0
    %532 = vmatpush1.msra.mxu0 0.0
    %533 = vmatprep.subr.mxu0 0.0
    %534 = vmatpush1.msra.mxu0 0.0
    %535 = vmatprep.subr.mxu0 0.0
    %536 = vmatpush1.msra.mxu0 0.0
    %537 = vmatprep.subr.mxu0 0.0
    %538 = vmatpush1.msra.mxu0 0.0
    %539 = vmatprep.subr.mxu0 0.0
    %540 = vmatpush1.msra.mxu0 0.0
    %541 = vmatprep.subr.mxu0 0.0
    %542 = vmatpush1.msra.mxu0 0.0
    %543 = vmatprep.subr.mxu0 0.0
    %544 = vmatpush1.msra.mxu0 0.0
    %545 = vmatprep.subr.mxu0 0.0
    %546 = vmatpush1.msra.mxu0 0.0
    %547 = vmatprep.subr.mxu0 0.0
    %548 = vmatpush1.msra.mxu0 0.0
    %549 = vmatprep.subr.mxu0 0.0
    %550 = vmatpush1.msra.mxu0 0.0
    %551 = vmatprep.subr.mxu0 0.0
    %552 = vmatpush1.msra.mxu0 0.0
    %553 = vmatprep.subr.mxu0 0.0
    %554 = vmatpush1.msra.mxu0 0.0
    %555 = vmatprep.subr.mxu0 0.0
    %556 = vmatpush1.msra.mxu0 0.0
    %557 = vmatprep.subr.mxu0 0.0
    %558 = vmatpush1.msra.mxu0 0.0
    %559 = vmatprep.subr.mxu0 0.0
    %560 = vmatpush1.msra.mxu0 0.0
    %561 = vmatprep.subr.mxu0 0.0
    %562 = vmatpush1.msra.mxu0 0.0
    %563 = vmatprep.subr.mxu0 0.0
    %564 = vmatpush1.msra.mxu0 0.0
    %565 = vmatprep.subr.mxu0 0.0
    %566 = vmatpush1.msra.mxu0 0.0
    %567 = vmatprep.subr.mxu0 0.0
    %568 = vmatpush1.msra.mxu0 0.0
    %569 = vmatprep.subr.mxu0 0.0
    %570 = vmatpush1.msra.mxu0 0.0
    %571 = vmatprep.subr.mxu0 0.0
    %572 = vmatpush1.msra.mxu0 0.0
    %573 = vmatprep.subr.mxu0 0.0
    %574 = vmatpush1.msra.mxu0 0.0
    %575 = vmatprep.subr.mxu0 0.0
    %576 = vmatpush1.msra.mxu0 0.0
    %577 = vmatprep.subr.mxu0 0.0
    %578 = vmatpush1.msra.mxu0 0.0
    %579 = vmatprep.subr.mxu0 0.0
    %580 = vmatpush1.msra.mxu0 0.0
    %581 = vmatprep.mubr.f32.mxu0 0.0
    %582 = vmatmul.mubr.f32.gmra.mrb[0].mxu0 %v515
    %v583 = vpop.f32.mrb[0].mxu0
    %v584 = vadd.f32 0.0, %v583
    %v585 = vpop.f32.mrb[0].mxu0
    %586 = vdwg.mxu0
    %v587 = vadd.f32 %v514, %v584
    %v588 = vxor.u32 %v587, 2147483648
    %v589 = vmul.f32 %v588, 1.442695
    %v590 = vpow.pop %v589
    %v591 = vadd.f32 %v590, 1.0
    %v592 = vrcp.pop %v591
    %v593 = vmul.f32 1.0, %v592
    %v594 = vadd.f32 %v584, %v368
    %596 = vrot.lane.b32.xlu0 %v594, 96
    %v597 = vpop.permute.xlu0 %596
    %v599 = vmul.f32 %v593, %v597
    %601 = vrot.lane.b32.xlu0 %v599, 32
    %v602 = vpop.permute.xlu0 %601
    %v604 = vadd.f32 %v514, %v602
    %v605 = vtanh.pop %v604
    %v606 = vsub.f32 %v506, %v605
    %608 = vrot.lane.b32.xlu0 %v606, 112
    %v609 = vpop.permute.xlu0 %608
    %v611 = vmul.f32 %v593, %v609
    %613 = vrot.lane.b32.xlu0 %v611, 16
    %v614 = vpop.permute.xlu0 %613
    %v616 = vadd.f32 %v605, %v614
    %618 = vrot.lane.b32.xlu0 %v616, 96
    %v619 = vpop.permute.xlu0 %618
    %s621 = scalar_lea.vmem [#allocation4], 4
    %622 = vst.msk [vmem:[%s621] sm:$0x3] %vm401, %v619
    %s623 = scalar_lea.vmem [#allocation3], 6
    %v624 = vld [vmem:[%s623] sm:$0x3]
    %v625 = vsel %vm281, %v619, 0
    %627 = vmatprep.subr.mxu0 0.0
    %628 = vmatpush1.msra.mxu0 %v276
    %629 = vmatprep.subr.mxu0 0.0
    %630 = vmatpush1.msra.mxu0 %v277
    %631 = vmatprep.subr.mxu0 0.0
    %632 = vmatpush1.msra.mxu0 0.0
    %633 = vmatprep.subr.mxu0 0.0
    %634 = vmatpush1.msra.mxu0 0.0
    %635 = vmatprep.subr.mxu0 0.0
    %636 = vmatpush1.msra.mxu0 0.0
    %637 = vmatprep.subr.mxu0 0.0
    %638 = vmatpush1.msra.mxu0 0.0
    %639 = vmatprep.subr.mxu0 0.0
    %640 = vmatpush1.msra.mxu0 0.0
    %641 = vmatprep.subr.mxu0 0.0
    %642 = vmatpush1.msra.mxu0 0.0
    %643 = vmatprep.subr.mxu0 0.0
    %644 = vmatpush1.msra.mxu0 0.0
    %645 = vmatprep.subr.mxu0 0.0
    %646 = vmatpush1.msra.mxu0 0.0
    %647 = vmatprep.subr.mxu0 0.0
    %648 = vmatpush1.msra.mxu0 0.0
    %649 = vmatprep.subr.mxu0 0.0
    %650 = vmatpush1.msra.mxu0 0.0
    %651 = vmatprep.subr.mxu0 0.0
    %652 = vmatpush1.msra.mxu0 0.0
    %653 = vmatprep.subr.mxu0 0.0
    %654 = vmatpush1.msra.mxu0 0.0
    %655 = vmatprep.subr.mxu0 0.0
    %656 = vmatpush1.msra.mxu0 0.0
    %657 = vmatprep.subr.mxu0 0.0
    %658 = vmatpush1.msra.mxu0 0.0
    %659 = vmatprep.subr.mxu0 0.0
    %660 = vmatpush1.msra.mxu0 0.0
    %661 = vmatprep.subr.mxu0 0.0
    %662 = vmatpush1.msra.mxu0 0.0
    %663 = vmatprep.subr.mxu0 0.0
    %664 = vmatpush1.msra.mxu0 0.0
    %665 = vmatprep.subr.mxu0 0.0
    %666 = vmatpush1.msra.mxu0 0.0
    %667 = vmatprep.subr.mxu0 0.0
    %668 = vmatpush1.msra.mxu0 0.0
    %669 = vmatprep.subr.mxu0 0.0
    %670 = vmatpush1.msra.mxu0 0.0
    %671 = vmatprep.subr.mxu0 0.0
    %672 = vmatpush1.msra.mxu0 0.0
    %673 = vmatprep.subr.mxu0 0.0
    %674 = vmatpush1.msra.mxu0 0.0
    %675 = vmatprep.subr.mxu0 0.0
    %676 = vmatpush1.msra.mxu0 0.0
    %677 = vmatprep.subr.mxu0 0.0
    %678 = vmatpush1.msra.mxu0 0.0
    %679 = vmatprep.subr.mxu0 0.0
    %680 = vmatpush1.msra.mxu0 0.0
    %681 = vmatprep.subr.mxu0 0.0
    %682 = vmatpush1.msra.mxu0 0.0
    %683 = vmatprep.subr.mxu0 0.0
    %684 = vmatpush1.msra.mxu0 0.0
    %685 = vmatprep.subr.mxu0 0.0
    %686 = vmatpush1.msra.mxu0 0.0
    %687 = vmatprep.subr.mxu0 0.0
    %688 = vmatpush1.msra.mxu0 0.0
    %689 = vmatprep.subr.mxu0 0.0
    %690 = vmatpush1.msra.mxu0 0.0
    %691 = vmatprep.mubr.f32.mxu0 0.0
    %692 = vmatmul.mubr.f32.gmra.mrb[0].mxu0 %v625
    %v693 = vpop.f32.mrb[0].mxu0
    %v694 = vadd.f32 0.0, %v693
    %v695 = vpop.f32.mrb[0].mxu0
    %696 = vdwg.mxu0
    %v697 = vadd.f32 %v624, %v694
    %v698 = vxor.u32 %v697, 2147483648
    %v699 = vmul.f32 %v698, 1.442695
    %v700 = vpow.pop %v699
    %v701 = vadd.f32 %v700, 1.0
    %v702 = vrcp.pop %v701
    %v703 = vmul.f32 1.0, %v702
    %v704 = vadd.f32 %v694, %v368
    %706 = vrot.lane.b32.xlu0 %v704, 96
    %v707 = vpop.permute.xlu0 %706
    %v709 = vmul.f32 %v703, %v707
    %711 = vrot.lane.b32.xlu0 %v709, 32
    %v712 = vpop.permute.xlu0 %711
    %v714 = vadd.f32 %v624, %v712
    %v715 = vtanh.pop %v714
    %v716 = vsub.f32 %v616, %v715
    %718 = vrot.lane.b32.xlu0 %v716, 112
    %v719 = vpop.permute.xlu0 %718
    %v721 = vmul.f32 %v703, %v719
    %723 = vrot.lane.b32.xlu0 %v721, 16
    %v724 = vpop.permute.xlu0 %723
    %v726 = vadd.f32 %v715, %v724
    %728 = vrot.lane.b32.xlu0 %v726, 96
    %v729 = vpop.permute.xlu0 %728
    %s731 = scalar_lea.vmem [#allocation4], 6
    %732 = vst.msk [vmem:[%s731] sm:$0x3] %vm401, %v729
    %s733 = scalar_lea.vmem [#allocation3], 8
    %v734 = vld [vmem:[%s733] sm:$0x3]
    %v735 = vsel %vm281, %v729, 0
    %737 = vmatprep.subr.mxu0 0.0
    %738 = vmatpush1.msra.mxu0 %v276
    %739 = vmatprep.subr.mxu0 0.0
    %740 = vmatpush1.msra.mxu0 %v277
    %741 = vmatprep.subr.mxu0 0.0
    %742 = vmatpush1.msra.mxu0 0.0
    %743 = vmatprep.subr.mxu0 0.0
    %744 = vmatpush1.msra.mxu0 0.0
    %745 = vmatprep.subr.mxu0 0.0
    %746 = vmatpush1.msra.mxu0 0.0
    %747 = vmatprep.subr.mxu0 0.0
    %748 = vmatpush1.msra.mxu0 0.0
    %749 = vmatprep.subr.mxu0 0.0
    %750 = vmatpush1.msra.mxu0 0.0
    %751 = vmatprep.subr.mxu0 0.0
    %752 = vmatpush1.msra.mxu0 0.0
    %753 = vmatprep.subr.mxu0 0.0
    %754 = vmatpush1.msra.mxu0 0.0
    %755 = vmatprep.subr.mxu0 0.0
    %756 = vmatpush1.msra.mxu0 0.0
    %757 = vmatprep.subr.mxu0 0.0
    %758 = vmatpush1.msra.mxu0 0.0
    %759 = vmatprep.subr.mxu0 0.0
    %760 = vmatpush1.msra.mxu0 0.0
    %761 = vmatprep.subr.mxu0 0.0
    %762 = vmatpush1.msra.mxu0 0.0
    %763 = vmatprep.subr.mxu0 0.0
    %764 = vmatpush1.msra.mxu0 0.0
    %765 = vmatprep.subr.mxu0 0.0
    %766 = vmatpush1.msra.mxu0 0.0
    %767 = vmatprep.subr.mxu0 0.0
    %768 = vmatpush1.msra.mxu0 0.0
    %769 = vmatprep.subr.mxu0 0.0
    %770 = vmatpush1.msra.mxu0 0.0
    %771 = vmatprep.subr.mxu0 0.0
    %772 = vmatpush1.msra.mxu0 0.0
    %773 = vmatprep.subr.mxu0 0.0
    %774 = vmatpush1.msra.mxu0 0.0
    %775 = vmatprep.subr.mxu0 0.0
    %776 = vmatpush1.msra.mxu0 0.0
    %777 = vmatprep.subr.mxu0 0.0
    %778 = vmatpush1.msra.mxu0 0.0
    %779 = vmatprep.subr.mxu0 0.0
    %780 = vmatpush1.msra.mxu0 0.0
    %781 = vmatprep.subr.mxu0 0.0
    %782 = vmatpush1.msra.mxu0 0.0
    %783 = vmatprep.subr.mxu0 0.0
    %784 = vmatpush1.msra.mxu0 0.0
    %785 = vmatprep.subr.mxu0 0.0
    %786 = vmatpush1.msra.mxu0 0.0
    %787 = vmatprep.subr.mxu0 0.0
    %788 = vmatpush1.msra.mxu0 0.0
    %789 = vmatprep.subr.mxu0 0.0
    %790 = vmatpush1.msra.mxu0 0.0
    %791 = vmatprep.subr.mxu0 0.0
    %792 = vmatpush1.msra.mxu0 0.0
    %793 = vmatprep.subr.mxu0 0.0
    %794 = vmatpush1.msra.mxu0 0.0
    %795 = vmatprep.subr.mxu0 0.0
    %796 = vmatpush1.msra.mxu0 0.0
    %797 = vmatprep.subr.mxu0 0.0
    %798 = vmatpush1.msra.mxu0 0.0
    %799 = vmatprep.subr.mxu0 0.0
    %800 = vmatpush1.msra.mxu0 0.0
    %801 = vmatprep.mubr.f32.mxu0 0.0
    %802 = vmatmul.mubr.f32.gmra.mrb[0].mxu0 %v735
    %v803 = vpop.f32.mrb[0].mxu0
    %v804 = vadd.f32 0.0, %v803
    %v805 = vpop.f32.mrb[0].mxu0
    %806 = vdwg.mxu0
    %v807 = vadd.f32 %v734, %v804
    %v808 = vxor.u32 %v807, 2147483648
    %v809 = vmul.f32 %v808, 1.442695
    %v810 = vpow.pop %v809
    %v811 = vadd.f32 %v810, 1.0
    %v812 = vrcp.pop %v811
    %v813 = vmul.f32 1.0, %v812
    %v814 = vadd.f32 %v804, %v368
    %816 = vrot.lane.b32.xlu0 %v814, 96
    %v817 = vpop.permute.xlu0 %816
    %v819 = vmul.f32 %v813, %v817
    %821 = vrot.lane.b32.xlu0 %v819, 32
    %v822 = vpop.permute.xlu0 %821
    %v824 = vadd.f32 %v734, %v822
    %v825 = vtanh.pop %v824
    %v826 = vsub.f32 %v726, %v825
    %828 = vrot.lane.b32.xlu0 %v826, 112
    %v829 = vpop.permute.xlu0 %828
    %v831 = vmul.f32 %v813, %v829
    %833 = vrot.lane.b32.xlu0 %v831, 16
    %v834 = vpop.permute.xlu0 %833
    %v836 = vadd.f32 %v825, %v834
    %838 = vrot.lane.b32.xlu0 %v836, 96
    %v839 = vpop.permute.xlu0 %838
    %s841 = scalar_lea.vmem [#allocation4], 8
    %842 = vst.msk [vmem:[%s841] sm:$0x3] %vm401, %v839
    %s843 = scalar_lea.vmem [#allocation3], 10
    %v844 = vld [vmem:[%s843] sm:$0x3]
    %v845 = vsel %vm281, %v839, 0
    %847 = vmatprep.subr.mxu0 0.0
    %848 = vmatpush1.msra.mxu0 %v276
    %849 = vmatprep.subr.mxu0 0.0
    %850 = vmatpush1.msra.mxu0 %v277
    %851 = vmatprep.subr.mxu0 0.0
    %852 = vmatpush1.msra.mxu0 0.0
    %853 = vmatprep.subr.mxu0 0.0
    %854 = vmatpush1.msra.mxu0 0.0
    %855 = vmatprep.subr.mxu0 0.0
    %856 = vmatpush1.msra.mxu0 0.0
    %857 = vmatprep.subr.mxu0 0.0
    %858 = vmatpush1.msra.mxu0 0.0
    %859 = vmatprep.subr.mxu0 0.0
    %860 = vmatpush1.msra.mxu0 0.0
    %861 = vmatprep.subr.mxu0 0.0
    %862 = vmatpush1.msra.mxu0 0.0
    %863 = vmatprep.subr.mxu0 0.0
    %864 = vmatpush1.msra.mxu0 0.0
    %865 = vmatprep.subr.mxu0 0.0
    %866 = vmatpush1.msra.mxu0 0.0
    %867 = vmatprep.subr.mxu0 0.0
    %868 = vmatpush1.msra.mxu0 0.0
    %869 = vmatprep.subr.mxu0 0.0
    %870 = vmatpush1.msra.mxu0 0.0
    %871 = vmatprep.subr.mxu0 0.0
    %872 = vmatpush1.msra.mxu0 0.0
    %873 = vmatprep.subr.mxu0 0.0
    %874 = vmatpush1.msra.mxu0 0.0
    %875 = vmatprep.subr.mxu0 0.0
    %876 = vmatpush1.msra.mxu0 0.0
    %877 = vmatprep.subr.mxu0 0.0
    %878 = vmatpush1.msra.mxu0 0.0
    %879 = vmatprep.subr.mxu0 0.0
    %880 = vmatpush1.msra.mxu0 0.0
    %881 = vmatprep.subr.mxu0 0.0
    %882 = vmatpush1.msra.mxu0 0.0
    %883 = vmatprep.subr.mxu0 0.0
    %884 = vmatpush1.msra.mxu0 0.0
    %885 = vmatprep.subr.mxu0 0.0
    %886 = vmatpush1.msra.mxu0 0.0
    %887 = vmatprep.subr.mxu0 0.0
    %888 = vmatpush1.msra.mxu0 0.0
    %889 = vmatprep.subr.mxu0 0.0
    %890 = vmatpush1.msra.mxu0 0.0
    %891 = vmatprep.subr.mxu0 0.0
    %892 = vmatpush1.msra.mxu0 0.0
    %893 = vmatprep.subr.mxu0 0.0
    %894 = vmatpush1.msra.mxu0 0.0
    %895 = vmatprep.subr.mxu0 0.0
    %896 = vmatpush1.msra.mxu0 0.0
    %897 = vmatprep.subr.mxu0 0.0
    %898 = vmatpush1.msra.mxu0 0.0
    %899 = vmatprep.subr.mxu0 0.0
    %900 = vmatpush1.msra.mxu0 0.0
    %901 = vmatprep.subr.mxu0 0.0
    %902 = vmatpush1.msra.mxu0 0.0
    %903 = vmatprep.subr.mxu0 0.0
    %904 = vmatpush1.msra.mxu0 0.0
    %905 = vmatprep.subr.mxu0 0.0
    %906 = vmatpush1.msra.mxu0 0.0
    %907 = vmatprep.subr.mxu0 0.0
    %908 = vmatpush1.msra.mxu0 0.0
    %909 = vmatprep.subr.mxu0 0.0
    %910 = vmatpush1.msra.mxu0 0.0
    %911 = vmatprep.mubr.f32.mxu0 0.0
    %912 = vmatmul.mubr.f32.gmra.mrb[0].mxu0 %v845
    %v913 = vpop.f32.mrb[0].mxu0
    %v914 = vadd.f32 0.0, %v913
    %v915 = vpop.f32.mrb[0].mxu0
    %916 = vdwg.mxu0
    %v917 = vadd.f32 %v844, %v914
    %v918 = vxor.u32 %v917, 2147483648
    %v919 = vmul.f32 %v918, 1.442695
    %v920 = vpow.pop %v919
    %v921 = vadd.f32 %v920, 1.0
    %v922 = vrcp.pop %v921
    %v923 = vmul.f32 1.0, %v922
    %v924 = vadd.f32 %v914, %v368
    %926 = vrot.lane.b32.xlu0 %v924, 96
    %v927 = vpop.permute.xlu0 %926
    %v929 = vmul.f32 %v923, %v927
    %931 = vrot.lane.b32.xlu0 %v929, 32
    %v932 = vpop.permute.xlu0 %931
    %v934 = vadd.f32 %v844, %v932
    %v935 = vtanh.pop %v934
    %v936 = vsub.f32 %v836, %v935
    %938 = vrot.lane.b32.xlu0 %v936, 112
    %v939 = vpop.permute.xlu0 %938
    %v941 = vmul.f32 %v923, %v939
    %943 = vrot.lane.b32.xlu0 %v941, 16
    %v944 = vpop.permute.xlu0 %943
    %v946 = vadd.f32 %v935, %v944
    %948 = vrot.lane.b32.xlu0 %v946, 96
    %v949 = vpop.permute.xlu0 %948
    %s951 = scalar_lea.vmem [#allocation4], 10
    %952 = vst.msk [vmem:[%s951] sm:$0x3] %vm401, %v949
    %s953 = scalar_lea.vmem [#allocation3], 12
    %v954 = vld [vmem:[%s953] sm:$0x3]
    %v955 = vsel %vm281, %v949, 0
    %957 = vmatprep.subr.mxu0 0.0
    %958 = vmatpush1.msra.mxu0 %v276
    %959 = vmatprep.subr.mxu0 0.0
    %960 = vmatpush1.msra.mxu0 %v277
    %961 = vmatprep.subr.mxu0 0.0
    %962 = vmatpush1.msra.mxu0 0.0
    %963 = vmatprep.subr.mxu0 0.0
    %964 = vmatpush1.msra.mxu0 0.0
    %965 = vmatprep.subr.mxu0 0.0
    %966 = vmatpush1.msra.mxu0 0.0
    %967 = vmatprep.subr.mxu0 0.0
    %968 = vmatpush1.msra.mxu0 0.0
    %969 = vmatprep.subr.mxu0 0.0
    %970 = vmatpush1.msra.mxu0 0.0
    %971 = vmatprep.subr.mxu0 0.0
    %972 = vmatpush1.msra.mxu0 0.0
    %973 = vmatprep.subr.mxu0 0.0
    %974 = vmatpush1.msra.mxu0 0.0
    %975 = vmatprep.subr.mxu0 0.0
    %976 = vmatpush1.msra.mxu0 0.0
    %977 = vmatprep.subr.mxu0 0.0
    %978 = vmatpush1.msra.mxu0 0.0
    %979 = vmatprep.subr.mxu0 0.0
    %980 = vmatpush1.msra.mxu0 0.0
    %981 = vmatprep.subr.mxu0 0.0
    %982 = vmatpush1.msra.mxu0 0.0
    %983 = vmatprep.subr.mxu0 0.0
    %984 = vmatpush1.msra.mxu0 0.0
    %985 = vmatprep.subr.mxu0 0.0
    %986 = vmatpush1.msra.mxu0 0.0
    %987 = vmatprep.subr.mxu0 0.0
    %988 = vmatpush1.msra.mxu0 0.0
    %989 = vmatprep.subr.mxu0 0.0
    %990 = vmatpush1.msra.mxu0 0.0
    %991 = vmatprep.subr.mxu0 0.0
    %992 = vmatpush1.msra.mxu0 0.0
    %993 = vmatprep.subr.mxu0 0.0
    %994 = vmatpush1.msra.mxu0 0.0
    %995 = vmatprep.subr.mxu0 0.0
    %996 = vmatpush1.msra.mxu0 0.0
    %997 = vmatprep.subr.mxu0 0.0
    %998 = vmatpush1.msra.mxu0 0.0
    %999 = vmatprep.subr.mxu0 0.0
    %1000 = vmatpush1.msra.mxu0 0.0
    %1001 = vmatprep.subr.mxu0 0.0
    %1002 = vmatpush1.msra.mxu0 0.0
    %1003 = vmatprep.subr.mxu0 0.0
    %1004 = vmatpush1.msra.mxu0 0.0
    %1005 = vmatprep.subr.mxu0 0.0
    %1006 = vmatpush1.msra.mxu0 0.0
    %1007 = vmatprep.subr.mxu0 0.0
    %1008 = vmatpush1.msra.mxu0 0.0
    %1009 = vmatprep.subr.mxu0 0.0
    %1010 = vmatpush1.msra.mxu0 0.0
    %1011 = vmatprep.subr.mxu0 0.0
    %1012 = vmatpush1.msra.mxu0 0.0
    %1013 = vmatprep.subr.mxu0 0.0
    %1014 = vmatpush1.msra.mxu0 0.0
    %1015 = vmatprep.subr.mxu0 0.0
    %1016 = vmatpush1.msra.mxu0 0.0
    %1017 = vmatprep.subr.mxu0 0.0
    %1018 = vmatpush1.msra.mxu0 0.0
    %1019 = vmatprep.subr.mxu0 0.0
    %1020 = vmatpush1.msra.mxu0 0.0
    %1021 = vmatprep.mubr.f32.mxu0 0.0
    %1022 = vmatmul.mubr.f32.gmra.mrb[0].mxu0 %v955
    %v1023 = vpop.f32.mrb[0].mxu0
    %v1024 = vadd.f32 0.0, %v1023
    %v1025 = vpop.f32.mrb[0].mxu0
    %1026 = vdwg.mxu0
    %v1027 = vadd.f32 %v954, %v1024
    %v1028 = vxor.u32 %v1027, 2147483648
    %v1029 = vmul.f32 %v1028, 1.442695
    %v1030 = vpow.pop %v1029
    %v1031 = vadd.f32 %v1030, 1.0
    %v1032 = vrcp.pop %v1031
    %v1033 = vmul.f32 1.0, %v1032
    %v1034 = vadd.f32 %v1024, %v368
    %1036 = vrot.lane.b32.xlu0 %v1034, 96
    %v1037 = vpop.permute.xlu0 %1036
    %v1039 = vmul.f32 %v1033, %v1037
    %1041 = vrot.lane.b32.xlu0 %v1039, 32
    %v1042 = vpop.permute.xlu0 %1041
    %v1044 = vadd.f32 %v954, %v1042
    %v1045 = vtanh.pop %v1044
    %v1046 = vsub.f32 %v946, %v1045
    %1048 = vrot.lane.b32.xlu0 %v1046, 112
    %v1049 = vpop.permute.xlu0 %1048
    %v1051 = vmul.f32 %v1033, %v1049
    %1053 = vrot.lane.b32.xlu0 %v1051, 16
    %v1054 = vpop.permute.xlu0 %1053
    %v1056 = vadd.f32 %v1045, %v1054
    %1058 = vrot.lane.b32.xlu0 %v1056, 96
    %v1059 = vpop.permute.xlu0 %1058
    %s1061 = scalar_lea.vmem [#allocation4], 12
    %1062 = vst.msk [vmem:[%s1061] sm:$0x3] %vm401, %v1059
    %s1063 = scalar_lea.vmem [#allocation3], 14
    %v1064 = vld [vmem:[%s1063] sm:$0x3]
    %v1065 = vsel %vm281, %v1059, 0
    %1067 = vmatprep.subr.mxu0 0.0
    %1068 = vmatpush1.msra.mxu0 %v276
    %1069 = vmatprep.subr.mxu0 0.0
    %1070 = vmatpush1.msra.mxu0 %v277
    %1071 = vmatprep.subr.mxu0 0.0
    %1072 = vmatpush1.msra.mxu0 0.0
    %1073 = vmatprep.subr.mxu0 0.0
    %1074 = vmatpush1.msra.mxu0 0.0
    %1075 = vmatprep.subr.mxu0 0.0
    %1076 = vmatpush1.msra.mxu0 0.0
    %1077 = vmatprep.subr.mxu0 0.0
    %1078 = vmatpush1.msra.mxu0 0.0
    %1079 = vmatprep.subr.mxu0 0.0
    %1080 = vmatpush1.msra.mxu0 0.0
    %1081 = vmatprep.subr.mxu0 0.0
    %1082 = vmatpush1.msra.mxu0 0.0
    %1083 = vmatprep.subr.mxu0 0.0
    %1084 = vmatpush1.msra.mxu0 0.0
    %1085 = vmatprep.subr.mxu0 0.0
    %1086 = vmatpush1.msra.mxu0 0.0
    %1087 = vmatprep.subr.mxu0 0.0
    %1088 = vmatpush1.msra.mxu0 0.0
    %1089 = vmatprep.subr.mxu0 0.0
    %1090 = vmatpush1.msra.mxu0 0.0
    %1091 = vmatprep.subr.mxu0 0.0
    %1092 = vmatpush1.msra.mxu0 0.0
    %1093 = vmatprep.subr.mxu0 0.0
    %1094 = vmatpush1.msra.mxu0 0.0
    %1095 = vmatprep.subr.mxu0 0.0
    %1096 = vmatpush1.msra.mxu0 0.0
    %1097 = vmatprep.subr.mxu0 0.0
    %1098 = vmatpush1.msra.mxu0 0.0
    %1099 = vmatprep.subr.mxu0 0.0
    %1100 = vmatpush1.msra.mxu0 0.0
    %1101 = vmatprep.subr.mxu0 0.0
    %1102 = vmatpush1.msra.mxu0 0.0
    %1103 = vmatprep.subr.mxu0 0.0
    %1104 = vmatpush1.msra.mxu0 0.0
    %1105 = vmatprep.subr.mxu0 0.0
    %1106 = vmatpush1.msra.mxu0 0.0
    %1107 = vmatprep.subr.mxu0 0.0
    %1108 = vmatpush1.msra.mxu0 0.0
    %1109 = vmatprep.subr.mxu0 0.0
    %1110 = vmatpush1.msra.mxu0 0.0
    %1111 = vmatprep.subr.mxu0 0.0
    %1112 = vmatpush1.msra.mxu0 0.0
    %1113 = vmatprep.subr.mxu0 0.0
    %1114 = vmatpush1.msra.mxu0 0.0
    %1115 = vmatprep.subr.mxu0 0.0
    %1116 = vmatpush1.msra.mxu0 0.0
    %1117 = vmatprep.subr.mxu0 0.0
    %1118 = vmatpush1.msra.mxu0 0.0
    %1119 = vmatprep.subr.mxu0 0.0
    %1120 = vmatpush1.msra.mxu0 0.0
    %1121 = vmatprep.subr.mxu0 0.0
    %1122 = vmatpush1.msra.mxu0 0.0
    %1123 = vmatprep.subr.mxu0 0.0
    %1124 = vmatpush1.msra.mxu0 0.0
    %1125 = vmatprep.subr.mxu0 0.0
    %1126 = vmatpush1.msra.mxu0 0.0
    %1127 = vmatprep.subr.mxu0 0.0
    %1128 = vmatpush1.msra.mxu0 0.0
    %1129 = vmatprep.subr.mxu0 0.0
    %1130 = vmatpush1.msra.mxu0 0.0
    %1131 = vmatprep.mubr.f32.mxu0 0.0
    %1132 = vmatmul.mubr.f32.gmra.mrb[0].mxu0 %v1065
    %v1133 = vpop.f32.mrb[0].mxu0
    %v1134 = vadd.f32 0.0, %v1133
    %v1135 = vpop.f32.mrb[0].mxu0
    %1136 = vdwg.mxu0
    %v1137 = vadd.f32 %v1064, %v1134
    %v1138 = vxor.u32 %v1137, 2147483648
    %v1139 = vmul.f32 %v1138, 1.442695
    %v1140 = vpow.pop %v1139
    %v1141 = vadd.f32 %v1140, 1.0
    %v1142 = vrcp.pop %v1141
    %v1143 = vmul.f32 1.0, %v1142
    %v1144 = vadd.f32 %v1134, %v368
    %1146 = vrot.lane.b32.xlu0 %v1144, 96
    %v1147 = vpop.permute.xlu0 %1146
    %v1149 = vmul.f32 %v1143, %v1147
    %1151 = vrot.lane.b32.xlu0 %v1149, 32
    %v1152 = vpop.permute.xlu0 %1151
    %v1154 = vadd.f32 %v1064, %v1152
    %v1155 = vtanh.pop %v1154
    %v1156 = vsub.f32 %v1056, %v1155
    %1158 = vrot.lane.b32.xlu0 %v1156, 112
    %v1159 = vpop.permute.xlu0 %1158
    %v1161 = vmul.f32 %v1143, %v1159
    %1163 = vrot.lane.b32.xlu0 %v1161, 16
    %v1164 = vpop.permute.xlu0 %1163
    %v1166 = vadd.f32 %v1155, %v1164
    %1168 = vrot.lane.b32.xlu0 %v1166, 96
    %v1169 = vpop.permute.xlu0 %1168
    %s1171 = scalar_lea.vmem [#allocation4], 14
    %1172 = vst.msk [vmem:[%s1171] sm:$0x3] %vm401, %v1169
    %1173 = vst.msk [vmem:[#allocation2] sm:$0x3] %vm401, %v1169
    %v1174 = vld [vmem:[%s8] sm:$0x1]
    %v1175 = vld [vmem:[#allocation5] sm:$0x1]
    %v1176 = vld [vmem:[%s1] sm:$0x1]
    %v1177 = vld [vmem:[#allocation4] sm:$0x3]
    %v1178 = vld [vmem:[#allocation4 + $0x2] sm:$0x3]
    %v1179 = vld [vmem:[#allocation4 + $0x4] sm:$0x3]
    %v1180 = vld [vmem:[#allocation4 + $0x6] sm:$0x3]
    %v1181 = vld [vmem:[#allocation4 + $0x8] sm:$0x3]
    %v1182 = vld [vmem:[#allocation4 + $0xa] sm:$0x3]
    %v1183 = vld [vmem:[#allocation4 + $0xc] sm:$0x3]
    %v1184 = vld [vmem:[#allocation4 + $0xe] sm:$0x3]
    %v1186 = vlaneseq
    %v1187 = vshrl.u32 %v1186, 7
    %v1188 = vsub.s32 0, %v1187
    %v1189 = vrot.slane %v1174, %v1188
    %v1191 = vmul.f32 %v1177, %v1189
    %v1192 = vmul.f32 %v1178, %v1189
    %v1193 = vmul.f32 %v1179, %v1189
    %v1194 = vmul.f32 %v1180, %v1189
    %v1195 = vmul.f32 %v1181, %v1189
    %v1196 = vmul.f32 %v1182, %v1189
    %v1197 = vmul.f32 %v1183, %v1189
    %v1198 = vmul.f32 %v1184, %v1189
    %v1199 = vsel %vm401, %v1191, 0.0
    %1200 = vadd.xlane.f32.xlu0 %v1199
    %v1201 = vpop.xlane.xlu0 %1200
    %v1202 = vsel %vm401, %v1192, 0.0
    %1203 = vadd.xlane.f32.xlu0 %v1202
    %v1204 = vpop.xlane.xlu0 %1203
    %v1205 = vsel %vm401, %v1193, 0.0
    %1206 = vadd.xlane.f32.xlu0 %v1205
    %v1207 = vpop.xlane.xlu0 %1206
    %v1208 = vsel %vm401, %v1194, 0.0
    %1209 = vadd.xlane.f32.xlu0 %v1208
    %v1210 = vpop.xlane.xlu0 %1209
    %v1211 = vsel %vm401, %v1195, 0.0
    %1212 = vadd.xlane.f32.xlu0 %v1211
    %v1213 = vpop.xlane.xlu0 %1212
    %v1214 = vsel %vm401, %v1196, 0.0
    %1215 = vadd.xlane.f32.xlu0 %v1214
    %v1216 = vpop.xlane.xlu0 %1215
    %v1217 = vsel %vm401, %v1197, 0.0
    %1218 = vadd.xlane.f32.xlu0 %v1217
    %v1219 = vpop.xlane.xlu0 %1218
    %v1220 = vsel %vm401, %v1198, 0.0
    %1221 = vadd.xlane.f32.xlu0 %v1220
    %v1222 = vpop.xlane.xlu0 %1221
    %s1223 = smul.u32 0, 8
    %v1224 = vlaneseq
    %v1225 = vshrl.u32 %v1224, 7
    %v1226 = vstv %s1223
    %v1227 = vadd.s32 %v1226, %v1225
    %v1228 = vlaneseq
    %v1229 = vshrl.u32 %v1228, 7
    %v1230 = vsub.s32 0, %v1229
    %v1231 = vrot.slane %v1176, %v1230
    %vm1232 = vcmp.lt.s32.totalorder %v1227, %v1231
    %v1241 = vlaneseq
    %v1242 = vand.u32 %v1241, 127
    %v1243 = vlaneseq
    %v1244 = vshrl.u32 %v1243, 7
    %v1245 = vsub.s32 %v1242, %v1244
    %v1246 = vrot.slane %v1201, %v1245
    %v1247 = vlaneseq
    %v1248 = vshrl.u32 %v1247, 7
    %v1249 = vsub.s32 %v1242, %v1248
    %v1250 = vrot.slane %v1204, %v1249
    %v1251 = vlaneseq
    %v1252 = vshrl.u32 %v1251, 7
    %v1253 = vsub.s32 %v1242, %v1252
    %v1254 = vrot.slane %v1207, %v1253
    %v1255 = vlaneseq
    %v1256 = vshrl.u32 %v1255, 7
    %v1257 = vsub.s32 %v1242, %v1256
    %v1258 = vrot.slane %v1210, %v1257
    %v1259 = vlaneseq
    %v1260 = vshrl.u32 %v1259, 7
    %v1261 = vsub.s32 %v1242, %v1260
    %v1262 = vrot.slane %v1213, %v1261
    %v1263 = vlaneseq
    %v1264 = vshrl.u32 %v1263, 7
    %v1265 = vsub.s32 %v1242, %v1264
    %v1266 = vrot.slane %v1216, %v1265
    %v1267 = vlaneseq
    %v1268 = vshrl.u32 %v1267, 7
    %v1269 = vsub.s32 %v1242, %v1268
    %v1270 = vrot.slane %v1219, %v1269
    %v1271 = vlaneseq
    %v1272 = vshrl.u32 %v1271, 7
    %v1273 = vsub.s32 %v1242, %v1272
    %v1274 = vrot.slane %v1222, %v1273
    %vm1275 = vcmask 1041409
    %v1276 = vsel %vm1275, %v1250, %v1246
    %vm1277 = vcmask 1042434
    %v1278 = vsel %vm1277, %v1254, %v1276
    %vm1279 = vcmask 1043459
    %v1280 = vsel %vm1279, %v1258, %v1278
    %vm1281 = vcmask 1044484
    %v1282 = vsel %vm1281, %v1262, %v1280
    %vm1283 = vcmask 1045509
    %v1284 = vsel %vm1283, %v1266, %v1282
    %vm1285 = vcmask 1046534
    %v1286 = vsel %vm1285, %v1270, %v1284
    %vm1287 = vcmask 1047559
    %v1288 = vsel %vm1287, %v1274, %v1286
    %v1290 = vsel %vm1232, %v1288, 0.0
    %v1292 = vlaneseq
    %v1293 = vshrl.u32 %v1292, 7
    %v1294 = vsub.s32 0, %v1293
    %v1295 = vrot.slane %v1175, %v1294
    %1296 = vset.pattern.permute.xlu0 0
    %1297 = vperm.xlu0 %1296, %v1295
    %v1298 = vpop.permute.xlu0 %1297
    %v1300 = vadd.f32 %v1290, %v1298
    %vm1301 = vcmask 15360
    %1302 = vst.msk [vmem:[%s10] sm:$0xff] %vm1301, %v1300
    // Predicated region
    $region58: #{tpu_custom_call.1} parent=1 // pred_check
      _
    $region59: #{tpu_custom_call.1} parent=1 // pred_check_branch
      %1304 = sbr.rel (0) target = $region61
    $region60: #{tpu_custom_call.1} parent=1 // pred_region
      _
    $region61: #{tpu_custom_call.1} parent=1 // pred_fallthru
      _
    // Predicated region
    $region62: #{tpu_custom_call.1} parent=1 // pred_check
      _
    $region63: #{tpu_custom_call.1} parent=1 // pred_check_branch
      %1306 = sbr.rel (0) target = $region65
    $region64: #{tpu_custom_call.1} parent=1 // pred_region
      _
    $region65: #{tpu_custom_call.1} parent=1 // pred_fallthru
      _
    %1307 = vsyncpa [#allocation7], 1
    %1308 = vsyncpa [#allocation9], 1

</llo_original>
